<compile_context>
chip_gen: v7x
topology: tpu7x:2x2x1
jax: 0.10.0
libtpu: 0.0.40
codegen_flags: <defaults>
</compile_context>

<pallas_src>
from functools import partial

import jax
import jax.numpy as jnp
from jax.experimental import pallas as pl
from jax.experimental.pallas import tpu as pltpu


def _gat_kernel(tgt_row_ref, src_row_ref, src_col_ref, x_ref, w_ref, b_ref,
                acat_ref, ab_ref, expand_ref, o_ref,
                h_sc, u_sc, v_sc, m_sc, s_sc, acc_sc,
                *, scaling, apply_act, gather_dtype):
    t = pl.program_id(0)
    n_tiles = pl.num_programs(0)
    H = ab_ref.shape[0]
    N = x_ref.shape[0]
    neg = jnp.float32(-1e30)   # finite "-inf" so 0 * neg stays finite in matmuls

    # ---- one-time init: fused linear for all heads + fused attention projections ----
    @pl.when(t == 0)
    def _init():
        h = jnp.dot(x_ref[...], w_ref[...],
                    preferred_element_type=jnp.float32) + b_ref[...]       # (N, H*D)
        h_sc[...] = h
        uv = jnp.dot(h, acat_ref[...], preferred_element_type=jnp.float32)  # (N, 2H) = [u || v]
        u_sc[...] = uv[:, 0:H].T                                            # (H, N)
        v_sc[...] = uv[:, H:2 * H].T                                        # (H, N)
        m_sc[...] = jnp.full_like(m_sc, neg)
        s_sc[...] = jnp.zeros_like(s_sc)
        acc_sc[...] = jnp.zeros_like(acc_sc)

    h = h_sc[...]                           # (N, HD)
    u_hn = u_sc[...]                        # (H, N)
    v_hn = v_sc[...]                        # (H, N)

    # ---- per-tile one-hot gather/scatter matrices from the edge-index blocks ----
    tgt = tgt_row_ref[...]                  # (1, Et) int32  (target nodes)
    src = src_row_ref[...]                  # (1, Et) int32  (source nodes)
    src_c = src_col_ref[...]                # (Et, 1) int32
    Et = tgt.shape[1]
    iota_ne = jax.lax.broadcasted_iota(jnp.int32, (N, Et), 0)
    iota_en = jax.lax.broadcasted_iota(jnp.int32, (Et, N), 1)
    tgt_mask_ne = iota_ne == tgt                         # (N, Et) bool
    tgt_ne = tgt_mask_ne.astype(jnp.float32)             # scatter-to-target / gather m
    src_ne = (iota_ne == src).astype(jnp.float32)        # (N, Et) gather-by-source (logits)
    src_en = (iota_en == src_c).astype(gather_dtype)     # (Et, N) gather-by-source (values)

    # ---- edge logits directly in lane-dense (H, Et) layout ----
    e_he = (jnp.dot(u_hn, tgt_ne, preferred_element_type=jnp.float32)
            + jnp.dot(v_hn, src_ne, preferred_element_type=jnp.float32)
            + ab_ref[...])                                # (H, Et)
    e_he = jnp.where(e_he >= 0, e_he, scaling * e_he)     # LeakyReLU(negative_slope)

    # ---- per-(node, head) tile max: one head at a time (no (H, N, E) tensor) ----
    cols = []
    for hh in range(H):
        scores = jnp.where(tgt_mask_ne, e_he[hh:hh + 1, :], neg)      # (N, Et)
        cols.append(jnp.max(scores, axis=-1, keepdims=True))          # (N, 1)
    m_tile_nh = jnp.concatenate(cols, axis=1)                         # (N, H)

    # ---- online-softmax state update ----
    m_old = m_sc[...]                                                 # (N, H)
    m_new = jnp.maximum(m_old, m_tile_nh)
    corr_nh = jnp.exp(m_old - m_new)                                  # rescale factor for old state
    m_sc[...] = m_new

    m_he = jnp.dot(m_new.T, tgt_ne, preferred_element_type=jnp.float32)   # (H, Et) max at edges
    p_he = jnp.exp(e_he - m_he)                                            # (H, Et), <= 1
    p_eh = p_he.T                                                          # (Et, H) small transpose

    s_sc[...] = corr_nh * s_sc[...] + jnp.dot(
        tgt_ne, p_eh, preferred_element_type=jnp.float32)                  # (N, H)

    # ---- messages + scatter-add aggregation (lane-dense; optionally bf16 MXU) ----
    h_j = jnp.dot(src_en, h.astype(gather_dtype),
                  preferred_element_type=jnp.float32)                      # (Et, HD)
    p_ehd = jnp.dot(p_eh, expand_ref[...],
                    preferred_element_type=jnp.float32)                    # (Et, HD)
    msg = p_ehd * h_j
    corr_nhd = jnp.dot(corr_nh, expand_ref[...],
                       preferred_element_type=jnp.float32)                 # (N, HD)
    acc_sc[...] = corr_nhd * acc_sc[...] + jnp.dot(
        tgt_ne.astype(gather_dtype), msg.astype(gather_dtype),
        preferred_element_type=jnp.float32)                                # (N, HD)

    # ---- finalize on the last edge tile ----
    @pl.when(t == n_tiles - 1)
    def _finalize():
        s_nhd = jnp.dot(s_sc[...], expand_ref[...],
                        preferred_element_type=jnp.float32)                # (N, HD)
        denom = jnp.where(s_nhd > 0.0, s_nhd, 1.0)      # isolated nodes: agg stays 0
        out = acc_sc[...] * pl.reciprocal(denom, approx=False) + h_sc[...]
        if apply_act:
            # ELU(alpha=1); clamp before exp so the unselected branch can't overflow
            out = jnp.where(out > 0, out, jnp.exp(jnp.minimum(out, 0.0)) - 1.0)
        o_ref[...] = out


def multihead_gat_forward(x, edge_index, W_all, b_all, ai_all, aj_all, ab_all,
                          scaling=0.2, apply_act=True,
                          use_bf16_gathers=True, edge_tile=128):
    assert edge_tile % 128 == 0, "edge tile must be lane-aligned"
    x = x.astype(jnp.float32)
    N, F_IN = x.shape
    H, _, D = W_all.shape
    HD = H * D
    E = edge_index.shape[1]

    # Pad the edge list to a multiple of the edge tile with out-of-range index N:
    # padded edges match no node in the one-hot compares and contribute nothing.
    n_tiles = max(1, -(-E // edge_tile))
    E_pad = n_tiles * edge_tile
    tgt = jnp.full((E_pad,), N, jnp.int32).at[:E].set(edge_index[0].astype(jnp.int32))
    src = jnp.full((E_pad,), N, jnp.int32).at[:E].set(edge_index[1].astype(jnp.int32))
    tgt_row = tgt.reshape(1, E_pad)
    src_row = src.reshape(1, E_pad)
    src_col = src.reshape(E_pad, 1)

    # Heads folded into the lane axis (head-major, dim-minor) == torch.cat(dim=-1).
    w_flat = jnp.transpose(W_all, (1, 0, 2)).reshape(F_IN, HD).astype(jnp.float32)
    b_flat = b_all.reshape(1, HD).astype(jnp.float32)

    # Fused block-diagonal attention projections: h @ a_cat = [u || v] of shape (N, 2H).
    eye_h = jnp.eye(H, dtype=jnp.float32)
    ai_blk = (ai_all.reshape(H, D)[:, :, None] * eye_h[:, None, :]).reshape(HD, H)
    aj_blk = (aj_all.reshape(H, D)[:, :, None] * eye_h[:, None, :]).reshape(HD, H)
    a_cat = jnp.concatenate([ai_blk, aj_blk], axis=1).astype(jnp.float32)   # (HD, 2H)
    ab = ab_all.reshape(H, 1).astype(jnp.float32)

    # Hoisted head->lane expansion one-hot: expand[h, h*D + d] = 1.
    expand = jnp.repeat(eye_h, D, axis=1).astype(jnp.float32)               # (H, HD)

    gather_dtype = jnp.bfloat16 if use_bf16_gathers else jnp.float32
    kernel = partial(_gat_kernel, scaling=float(scaling),
                     apply_act=bool(apply_act), gather_dtype=gather_dtype)

    flops = (2 * N * F_IN * HD + 4 * N * HD * H
             + E_pad * (8 * H * N + 4 * N * HD + 2 * H * HD)
             + n_tiles * 2 * N * H * HD)
    cost = pl.CostEstimate(
        flops=flops,
        transcendentals=E_pad * H + n_tiles * N * H + N * HD,
        bytes_accessed=4 * (x.size + w_flat.size + b_flat.size + a_cat.size
                            + ab.size + expand.size + N * HD) + 4 * 3 * E_pad)

    out = pl.pallas_call(
        kernel,
        out_shape=jax.ShapeDtypeStruct((N, HD), jnp.float32),
        grid=(n_tiles,),
        in_specs=[
            pl.BlockSpec((1, edge_tile), lambda t: (0, t)),    # target indices (row)
            pl.BlockSpec((1, edge_tile), lambda t: (0, t)),    # source indices (row)
            pl.BlockSpec((edge_tile, 1), lambda t: (t, 0)),    # source indices (column)
            pl.BlockSpec((N, F_IN), lambda t: (0, 0)),         # node features
            pl.BlockSpec((F_IN, HD), lambda t: (0, 0)),        # W (all heads, lane-stacked)
            pl.BlockSpec((1, HD), lambda t: (0, 0)),           # bias (all heads)
            pl.BlockSpec((HD, 2 * H), lambda t: (0, 0)),       # fused block-diag attn weights
            pl.BlockSpec((H, 1), lambda t: (0, 0)),            # attn bias per head
            pl.BlockSpec((H, HD), lambda t: (0, 0)),           # head->lane expansion one-hot
        ],
        out_specs=pl.BlockSpec((N, HD), lambda t: (0, 0)),     # lane-dense (N, H*D) output
        scratch_shapes=[
            pltpu.VMEM((N, HD), jnp.float32),                  # h (transformed features)
            pltpu.VMEM((H, N), jnp.float32),                   # u = attn proj on h_i
            pltpu.VMEM((H, N), jnp.float32),                   # v = attn proj on h_j
            pltpu.VMEM((N, H), jnp.float32),                   # running per-node max
            pltpu.VMEM((N, H), jnp.float32),                   # running per-node exp-sum
            pltpu.VMEM((N, HD), jnp.float32),                  # running weighted message sum
        ],
        compiler_params=pltpu.CompilerParams(
            dimension_semantics=("arbitrary",),
            vmem_limit_bytes=48 * 1024 * 1024),                # fits v7x's 64 MiB VMEM
        cost_estimate=cost,
    )(tgt_row, src_row, src_col, x, w_flat, b_flat, a_cat, ab, expand)
    return out


def _ref_forward(x, tgt, src, W_all, b_all, a_all, ab_all, scaling, apply_act):
    """Pure-JAX reference mirroring the PyTorch module (eval mode)."""
    N = x.shape[0]
    outs = []
    for hd in range(W_all.shape[0]):
        h = x @ W_all[hd] + b_all[hd].reshape(-1)
        h_i = h[tgt]
        h_j = h[src]
        e = jnp.concatenate([h_i, h_j], axis=-1) @ a_all[hd].reshape(-1, 1)
        e = e + ab_all[hd].reshape(())
        e = jnp.where(e >= 0, e, scaling * e)
        e = e[:, 0]
        m = jax.ops.segment_max(e, tgt, num_segments=N)
        exp_e = jnp.exp(e - m[tgt])
        s = jax.ops.segment_sum(exp_e, tgt, num_segments=N)
        alpha = exp_e / s[tgt]
        msg = alpha[:, None] * h_j
        agg = jax.ops.segment_sum(msg, tgt, num_segments=N)
        out = agg + h
        if apply_act:
            out = jnp.where(out > 0, out, jnp.exp(jnp.minimum(out, 0.0)) - 1.0)
        outs.append(out)
    return jnp.concatenate(outs, axis=-1)


if __name__ == "__main__":
    key = jax.random.PRNGKey(0)
    N, F_IN, HID, HEADS, E = 16, 16, 32, 4, 200
    D = HID // HEADS          # head_dimension = n_hidden_features // num_heads
    SCALING = 0.2
    APPLY_ACT = True
    EDGE_TILE = 128           # E=200 -> 2 edge tiles: exercises the online softmax

    ks = jax.random.split(key, 7)
    x = jax.random.normal(ks[0], (N, F_IN), jnp.float32)
    tgt = jax.random.randint(ks[1], (E,), 0, N, jnp.int32)
    src = jax.random.randint(ks[2], (E,), 0, N, jnp.int32)
    edge_index = jnp.stack([tgt, src], axis=0)   # (2, E): row0 = target, row1 = source

    # deterministic per-head parameters (W: Linear(F->D), attn: Linear(2D->1))
    W_all = 0.1 * jax.random.normal(ks[3], (HEADS, F_IN, D), jnp.float32)
    b_all = 0.1 * jax.random.normal(ks[4], (HEADS, 1, D), jnp.float32)
    a_all = 0.1 * jax.random.normal(ks[5], (HEADS, 2 * D), jnp.float32)
    ab_all = 0.1 * jax.random.normal(ks[6], (HEADS, 1, 1), jnp.float32)
    ai_all = a_all[:, :D].reshape(HEADS, D, 1)   # attn weights acting on h_i
    aj_all = a_all[:, D:].reshape(HEADS, D, 1)   # attn weights acting on h_j

    ref = _ref_forward(x, tgt, src, W_all, b_all, a_all, ab_all, SCALING, APPLY_ACT)

    # Fast path: bf16 one-hot gather/scatter on the MXU (0/1 exact, h/msg rounded).
    out_fast = multihead_gat_forward(x, edge_index, W_all, b_all, ai_all, aj_all,
                                     ab_all, scaling=SCALING, apply_act=APPLY_ACT,
                                     use_bf16_gathers=True, edge_tile=EDGE_TILE)
    out_fast = jax.block_until_ready(out_fast)
    assert out_fast.shape == (N, HID), out_fast.shape
    err_fast = float(jnp.max(jnp.abs(out_fast - ref)))
    assert err_fast < 2e-2, err_fast

    # Exact path: full f32 gather/scatter matmuls, tight tolerance.
    out_f32 = multihead_gat_forward(x, edge_index, W_all, b_all, ai_all, aj_all,
                                    ab_all, scaling=SCALING, apply_act=APPLY_ACT,
                                    use_bf16_gathers=False, edge_tile=EDGE_TILE)
    out_f32 = jax.block_until_ready(out_f32)
    err_f32 = float(jnp.max(jnp.abs(out_f32 - ref)))
    assert jnp.allclose(out_f32, ref, atol=1e-4, rtol=1e-4), err_f32

    print("KERNEL_OK")
</pallas_src>

<mosaic_0001>
module attributes {stable_mosaic.version = 11 : i64} {
  func.func @_gat_kernel(%arg0: i32, %arg1: memref<1x128xi32, #tpu.memory_space<vmem>>, %arg2: memref<1x128xi32, #tpu.memory_space<vmem>>, %arg3: memref<128x1xi32, #tpu.memory_space<vmem>>, %arg4: memref<16x16xf32, #tpu.memory_space<vmem>>, %arg5: memref<16x32xf32, #tpu.memory_space<vmem>>, %arg6: memref<1x32xf32, #tpu.memory_space<vmem>>, %arg7: memref<32x8xf32, #tpu.memory_space<vmem>>, %arg8: memref<4x1xf32, #tpu.memory_space<vmem>>, %arg9: memref<4x32xf32, #tpu.memory_space<vmem>>, %arg10: memref<16x32xf32, #tpu.memory_space<vmem>>, %arg11: memref<16x32xf32, #tpu.memory_space<vmem>>, %arg12: memref<4x16xf32, #tpu.memory_space<vmem>>, %arg13: memref<4x16xf32, #tpu.memory_space<vmem>>, %arg14: memref<16x4xf32, #tpu.memory_space<vmem>>, %arg15: memref<16x4xf32, #tpu.memory_space<vmem>>, %arg16: memref<16x32xf32, #tpu.memory_space<vmem>>) attributes {dimension_semantics = [#tpu.dimension_semantics<arbitrary>], iteration_bounds = array<i64: 2>, scalar_prefetch = 0 : i64, scratch_operands = 6 : i64, tpu.core_type = #tpu.core_type<tc>, window_params = [{transform_indices = @transform_0, window_bounds = array<i64: 1, 128>}, {transform_indices = @transform_1, window_bounds = array<i64: 1, 128>}, {transform_indices = @transform_2, window_bounds = array<i64: 128, 1>}, {pipeline_mode = #tpu.pipeline_mode<synchronous>, transform_indices = @transform_3, window_bounds = array<i64: 16, 16>}, {pipeline_mode = #tpu.pipeline_mode<synchronous>, transform_indices = @transform_4, window_bounds = array<i64: 16, 32>}, {pipeline_mode = #tpu.pipeline_mode<synchronous>, transform_indices = @transform_5, window_bounds = array<i64: 1, 32>}, {pipeline_mode = #tpu.pipeline_mode<synchronous>, transform_indices = @transform_6, window_bounds = array<i64: 32, 8>}, {pipeline_mode = #tpu.pipeline_mode<synchronous>, transform_indices = @transform_7, window_bounds = array<i64: 4, 1>}, {pipeline_mode = #tpu.pipeline_mode<synchronous>, transform_indices = @transform_8, window_bounds = array<i64: 4, 32>}, {pipeline_mode = #tpu.pipeline_mode<synchronous>, transform_indices = @transform_9, window_bounds = array<i64: 16, 32>}]} {
    %c0_i32 = arith.constant 0 : i32
    %0 = arith.cmpi eq, %arg0, %c0_i32 : i32
    %1 = arith.extui %0 : i1 to i32
    %cst = arith.constant -1.000000e+30 : f32
    %c0_i32_0 = arith.constant 0 : i32
    %2 = arith.cmpi ne, %1, %c0_i32_0 : i32
    scf.if %2 {
      %c0_49 = arith.constant 0 : index
      %c0_50 = arith.constant 0 : index
      %96 = vector.load %arg4[%c0_49, %c0_50] : memref<16x16xf32, #tpu.memory_space<vmem>>, vector<16x16xf32>
      %c0_51 = arith.constant 0 : index
      %c0_52 = arith.constant 0 : index
      %97 = vector.load %arg5[%c0_51, %c0_52] : memref<16x32xf32, #tpu.memory_space<vmem>>, vector<16x32xf32>
      %cst_53 = arith.constant dense<0.000000e+00> : vector<16x32xf32>
      %98 = tpu.matmul %96, %97, %cst_53 {dimension_numbers = #tpu.dot_dimension_numbers<[1], [0], [0], [1], [0, 0, 1, 1], [], []>} : vector<16x16xf32>, vector<16x32xf32>, vector<16x32xf32> -> vector<16x32xf32>
      %c0_54 = arith.constant 0 : index
      %c0_55 = arith.constant 0 : index
      %99 = vector.load %arg6[%c0_54, %c0_55] : memref<1x32xf32, #tpu.memory_space<vmem>>, vector<1x32xf32>
      %100 = vector.broadcast %99 : vector<1x32xf32> to vector<16x32xf32>
      %101 = arith.addf %98, %100 : vector<16x32xf32>
      %c0_56 = arith.constant 0 : index
      %c0_57 = arith.constant 0 : index
      %102 = vector.load %arg11[%c0_56, %c0_57] : memref<16x32xf32, #tpu.memory_space<vmem>>, vector<16x32xf32>
      tpu.vector_store %arg11[%c0_56, %c0_57], %101 {strides = array<i32>} : memref<16x32xf32, #tpu.memory_space<vmem>>, vector<16x32xf32>,
      %c0_58 = arith.constant 0 : index
      %c0_59 = arith.constant 0 : index
      %103 = vector.load %arg7[%c0_58, %c0_59] : memref<32x8xf32, #tpu.memory_space<vmem>>, vector<32x8xf32>
      %cst_60 = arith.constant dense<0.000000e+00> : vector<16x8xf32>
      %104 = tpu.matmul %101, %103, %cst_60 {dimension_numbers = #tpu.dot_dimension_numbers<[1], [0], [0], [1], [0, 0, 1, 1], [], []>} : vector<16x32xf32>, vector<32x8xf32>, vector<16x8xf32> -> vector<16x8xf32>
      %105 = vector.extract_strided_slice %104 {offsets = [0, 0], sizes = [16, 4], strides = [1, 1]} : vector<16x8xf32> to vector<16x4xf32>
      %106 = tpu.transpose %105, [1, 0] : vector<16x4xf32> -> vector<4x16xf32>
      %c0_61 = arith.constant 0 : index
      %c0_62 = arith.constant 0 : index
      %107 = vector.load %arg12[%c0_61, %c0_62] : memref<4x16xf32, #tpu.memory_space<vmem>>, vector<4x16xf32>
      tpu.vector_store %arg12[%c0_61, %c0_62], %106 {strides = array<i32>} : memref<4x16xf32, #tpu.memory_space<vmem>>, vector<4x16xf32>,
      %108 = vector.extract_strided_slice %104 {offsets = [0, 4], sizes = [16, 4], strides = [1, 1]} : vector<16x8xf32> to vector<16x4xf32>
      %109 = tpu.transpose %108, [1, 0] : vector<16x4xf32> -> vector<4x16xf32>
      %c0_63 = arith.constant 0 : index
      %c0_64 = arith.constant 0 : index
      %110 = vector.load %arg13[%c0_63, %c0_64] : memref<4x16xf32, #tpu.memory_space<vmem>>, vector<4x16xf32>
      tpu.vector_store %arg13[%c0_63, %c0_64], %109 {strides = array<i32>} : memref<4x16xf32, #tpu.memory_space<vmem>>, vector<4x16xf32>,
      %111 = vector.broadcast %cst : f32 to vector<16x4xf32>
      %c0_65 = arith.constant 0 : index
      %c0_66 = arith.constant 0 : index
      %112 = vector.load %arg14[%c0_65, %c0_66] : memref<16x4xf32, #tpu.memory_space<vmem>>, vector<16x4xf32>
      tpu.vector_store %arg14[%c0_65, %c0_66], %111 {strides = array<i32>} : memref<16x4xf32, #tpu.memory_space<vmem>>, vector<16x4xf32>,
      %cst_67 = arith.constant 0.000000e+00 : f32
      %113 = vector.broadcast %cst_67 : f32 to vector<16x4xf32>
      %c0_68 = arith.constant 0 : index
      %c0_69 = arith.constant 0 : index
      %114 = vector.load %arg15[%c0_68, %c0_69] : memref<16x4xf32, #tpu.memory_space<vmem>>, vector<16x4xf32>
      tpu.vector_store %arg15[%c0_68, %c0_69], %113 {strides = array<i32>} : memref<16x4xf32, #tpu.memory_space<vmem>>, vector<16x4xf32>,
      %cst_70 = arith.constant 0.000000e+00 : f32
      %115 = vector.broadcast %cst_70 : f32 to vector<16x32xf32>
      %c0_71 = arith.constant 0 : index
      %c0_72 = arith.constant 0 : index
      %116 = vector.load %arg16[%c0_71, %c0_72] : memref<16x32xf32, #tpu.memory_space<vmem>>, vector<16x32xf32>
      tpu.vector_store %arg16[%c0_71, %c0_72], %115 {strides = array<i32>} : memref<16x32xf32, #tpu.memory_space<vmem>>, vector<16x32xf32>,
    } else {
    }
    %c0 = arith.constant 0 : index
    %c0_1 = arith.constant 0 : index
    %3 = vector.load %arg11[%c0, %c0_1] : memref<16x32xf32, #tpu.memory_space<vmem>>, vector<16x32xf32>
    %c0_2 = arith.constant 0 : index
    %c0_3 = arith.constant 0 : index
    %4 = vector.load %arg12[%c0_2, %c0_3] : memref<4x16xf32, #tpu.memory_space<vmem>>, vector<4x16xf32>
    %c0_4 = arith.constant 0 : index
    %c0_5 = arith.constant 0 : index
    %5 = vector.load %arg13[%c0_4, %c0_5] : memref<4x16xf32, #tpu.memory_space<vmem>>, vector<4x16xf32>
    %c0_6 = arith.constant 0 : index
    %c0_7 = arith.constant 0 : index
    %6 = vector.load %arg1[%c0_6, %c0_7] : memref<1x128xi32, #tpu.memory_space<vmem>>, vector<1x128xi32>
    %c0_8 = arith.constant 0 : index
    %c0_9 = arith.constant 0 : index
    %7 = vector.load %arg2[%c0_8, %c0_9] : memref<1x128xi32, #tpu.memory_space<vmem>>, vector<1x128xi32>
    %c0_10 = arith.constant 0 : index
    %c0_11 = arith.constant 0 : index
    %8 = vector.load %arg3[%c0_10, %c0_11] : memref<128x1xi32, #tpu.memory_space<vmem>>, vector<128x1xi32>
    %9 = tpu.iota {dimensions = array<i32: 0>} : vector<16x128xi32>
    %10 = tpu.iota {dimensions = array<i32: 1>} : vector<128x16xi32>
    %11 = vector.broadcast %6 : vector<1x128xi32> to vector<16x128xi32>
    %12 = arith.cmpi eq, %9, %11 : vector<16x128xi32>
    %13 = arith.extui %12 : vector<16x128xi1> to vector<16x128xi32>
    %14 = arith.sitofp %13 : vector<16x128xi32> to vector<16x128xf32>
    %15 = vector.broadcast %7 : vector<1x128xi32> to vector<16x128xi32>
    %16 = arith.cmpi eq, %9, %15 : vector<16x128xi32>
    %17 = arith.extui %16 : vector<16x128xi1> to vector<16x128xi32>
    %18 = arith.sitofp %17 : vector<16x128xi32> to vector<16x128xf32>
    %19 = vector.broadcast %8 : vector<128x1xi32> to vector<128x16xi32>
    %20 = arith.cmpi eq, %10, %19 : vector<128x16xi32>
    %21 = arith.extui %20 : vector<128x16xi1> to vector<128x16xi32>
    %22 = arith.sitofp %21 : vector<128x16xi32> to vector<128x16xf32>
    %23 = arith.truncf %22 : vector<128x16xf32> to vector<128x16xbf16>
    %cst_12 = arith.constant dense<0.000000e+00> : vector<4x128xf32>
    %24 = tpu.matmul %4, %14, %cst_12 {dimension_numbers = #tpu.dot_dimension_numbers<[1], [0], [0], [1], [0, 0, 1, 1], [], []>} : vector<4x16xf32>, vector<16x128xf32>, vector<4x128xf32> -> vector<4x128xf32>
    %cst_13 = arith.constant dense<0.000000e+00> : vector<4x128xf32>
    %25 = tpu.matmul %5, %18, %cst_13 {dimension_numbers = #tpu.dot_dimension_numbers<[1], [0], [0], [1], [0, 0, 1, 1], [], []>} : vector<4x16xf32>, vector<16x128xf32>, vector<4x128xf32> -> vector<4x128xf32>
    %26 = arith.addf %24, %25 : vector<4x128xf32>
    %c0_14 = arith.constant 0 : index
    %c0_15 = arith.constant 0 : index
    %27 = vector.load %arg8[%c0_14, %c0_15] : memref<4x1xf32, #tpu.memory_space<vmem>>, vector<4x1xf32>
    %28 = vector.broadcast %27 : vector<4x1xf32> to vector<4x128xf32>
    %29 = arith.addf %26, %28 : vector<4x128xf32>
    %cst_16 = arith.constant 0.000000e+00 : f32
    %30 = vector.broadcast %cst_16 : f32 to vector<4x128xf32>
    %31 = arith.cmpf oge, %29, %30 : vector<4x128xf32>
    %cst_17 = arith.constant 2.000000e-01 : f32
    %32 = vector.broadcast %cst_17 : f32 to vector<4x128xf32>
    %33 = arith.mulf %32, %29 : vector<4x128xf32>
    %34 = arith.select %31, %29, %33 : vector<4x128xi1>, vector<4x128xf32>
    %35 = vector.extract_strided_slice %34 {offsets = [0, 0], sizes = [1, 128], strides = [1, 1]} : vector<4x128xf32> to vector<1x128xf32>
    %cst_18 = arith.constant -1.000000e+30 : f32
    %36 = vector.shape_cast %35 : vector<1x128xf32> to vector<1x128xf32>
    %37 = vector.broadcast %36 : vector<1x128xf32> to vector<16x128xf32>
    %38 = vector.broadcast %cst_18 : f32 to vector<16x128xf32>
    %39 = arith.select %12, %37, %38 : vector<16x128xi1>, vector<16x128xf32>
    %cst_19 = arith.constant dense<0xFF800000> : vector<16xf32>
    %40 = vector.multi_reduction <maximumf>, %39, %cst_19 [1] : vector<16x128xf32> to vector<16xf32>
    %41 = vector.shape_cast %40 : vector<16xf32> to vector<16x1xf32>
    %42 = vector.extract_strided_slice %34 {offsets = [1, 0], sizes = [1, 128], strides = [1, 1]} : vector<4x128xf32> to vector<1x128xf32>
    %cst_20 = arith.constant -1.000000e+30 : f32
    %43 = vector.shape_cast %42 : vector<1x128xf32> to vector<1x128xf32>
    %44 = vector.broadcast %43 : vector<1x128xf32> to vector<16x128xf32>
    %45 = vector.broadcast %cst_20 : f32 to vector<16x128xf32>
    %46 = arith.select %12, %44, %45 : vector<16x128xi1>, vector<16x128xf32>
    %cst_21 = arith.constant dense<0xFF800000> : vector<16xf32>
    %47 = vector.multi_reduction <maximumf>, %46, %cst_21 [1] : vector<16x128xf32> to vector<16xf32>
    %48 = vector.shape_cast %47 : vector<16xf32> to vector<16x1xf32>
    %49 = vector.extract_strided_slice %34 {offsets = [2, 0], sizes = [1, 128], strides = [1, 1]} : vector<4x128xf32> to vector<1x128xf32>
    %cst_22 = arith.constant -1.000000e+30 : f32
    %50 = vector.shape_cast %49 : vector<1x128xf32> to vector<1x128xf32>
    %51 = vector.broadcast %50 : vector<1x128xf32> to vector<16x128xf32>
    %52 = vector.broadcast %cst_22 : f32 to vector<16x128xf32>
    %53 = arith.select %12, %51, %52 : vector<16x128xi1>, vector<16x128xf32>
    %cst_23 = arith.constant dense<0xFF800000> : vector<16xf32>
    %54 = vector.multi_reduction <maximumf>, %53, %cst_23 [1] : vector<16x128xf32> to vector<16xf32>
    %55 = vector.shape_cast %54 : vector<16xf32> to vector<16x1xf32>
    %56 = vector.extract_strided_slice %34 {offsets = [3, 0], sizes = [1, 128], strides = [1, 1]} : vector<4x128xf32> to vector<1x128xf32>
    %cst_24 = arith.constant -1.000000e+30 : f32
    %57 = vector.shape_cast %56 : vector<1x128xf32> to vector<1x128xf32>
    %58 = vector.broadcast %57 : vector<1x128xf32> to vector<16x128xf32>
    %59 = vector.broadcast %cst_24 : f32 to vector<16x128xf32>
    %60 = arith.select %12, %58, %59 : vector<16x128xi1>, vector<16x128xf32>
    %cst_25 = arith.constant dense<0xFF800000> : vector<16xf32>
    %61 = vector.multi_reduction <maximumf>, %60, %cst_25 [1] : vector<16x128xf32> to vector<16xf32>
    %62 = vector.shape_cast %61 : vector<16xf32> to vector<16x1xf32>
    %63 = tpu.concatenate %41, %48, %55, %62 in 1 : vector<16x1xf32>, vector<16x1xf32>, vector<16x1xf32>, vector<16x1xf32> -> vector<16x4xf32>
    %c0_26 = arith.constant 0 : index
    %c0_27 = arith.constant 0 : index
    %64 = vector.load %arg14[%c0_26, %c0_27] : memref<16x4xf32, #tpu.memory_space<vmem>>, vector<16x4xf32>
    %65 = arith.maximumf %64, %63 : vector<16x4xf32>
    %66 = arith.subf %64, %65 : vector<16x4xf32>
    %67 = math.exp %66 : vector<16x4xf32>
    %c0_28 = arith.constant 0 : index
    %c0_29 = arith.constant 0 : index
    %68 = vector.load %arg14[%c0_28, %c0_29] : memref<16x4xf32, #tpu.memory_space<vmem>>, vector<16x4xf32>
    tpu.vector_store %arg14[%c0_28, %c0_29], %65 {strides = array<i32>} : memref<16x4xf32, #tpu.memory_space<vmem>>, vector<16x4xf32>,
    %69 = tpu.transpose %65, [1, 0] : vector<16x4xf32> -> vector<4x16xf32>
    %cst_30 = arith.constant dense<0.000000e+00> : vector<4x128xf32>
    %70 = tpu.matmul %69, %14, %cst_30 {dimension_numbers = #tpu.dot_dimension_numbers<[1], [0], [0], [1], [0, 0, 1, 1], [], []>} : vector<4x16xf32>, vector<16x128xf32>, vector<4x128xf32> -> vector<4x128xf32>
    %71 = arith.subf %34, %70 : vector<4x128xf32>
    %72 = math.exp %71 : vector<4x128xf32>
    %73 = tpu.transpose %72, [1, 0] : vector<4x128xf32> -> vector<128x4xf32>
    %c0_31 = arith.constant 0 : index
    %c0_32 = arith.constant 0 : index
    %74 = vector.load %arg15[%c0_31, %c0_32] : memref<16x4xf32, #tpu.memory_space<vmem>>, vector<16x4xf32>
    %75 = arith.mulf %67, %74 : vector<16x4xf32>
    %cst_33 = arith.constant dense<0.000000e+00> : vector<16x4xf32>
    %76 = tpu.matmul %14, %73, %cst_33 {dimension_numbers = #tpu.dot_dimension_numbers<[1], [0], [0], [1], [0, 0, 1, 1], [], []>} : vector<16x128xf32>, vector<128x4xf32>, vector<16x4xf32> -> vector<16x4xf32>
    %77 = arith.addf %75, %76 : vector<16x4xf32>
    %c0_34 = arith.constant 0 : index
    %c0_35 = arith.constant 0 : index
    %78 = vector.load %arg15[%c0_34, %c0_35] : memref<16x4xf32, #tpu.memory_space<vmem>>, vector<16x4xf32>
    tpu.vector_store %arg15[%c0_34, %c0_35], %77 {strides = array<i32>} : memref<16x4xf32, #tpu.memory_space<vmem>>, vector<16x4xf32>,
    %79 = arith.truncf %3 : vector<16x32xf32> to vector<16x32xbf16>
    %cst_36 = arith.constant dense<0.000000e+00> : vector<128x32xf32>
    %80 = tpu.matmul %23, %79, %cst_36 {dimension_numbers = #tpu.dot_dimension_numbers<[1], [0], [0], [1], [0, 0, 1, 1], [], []>} : vector<128x16xbf16>, vector<16x32xbf16>, vector<128x32xf32> -> vector<128x32xf32>
    %c0_37 = arith.constant 0 : index
    %c0_38 = arith.constant 0 : index
    %81 = vector.load %arg9[%c0_37, %c0_38] : memref<4x32xf32, #tpu.memory_space<vmem>>, vector<4x32xf32>
    %cst_39 = arith.constant dense<0.000000e+00> : vector<128x32xf32>
    %82 = tpu.matmul %73, %81, %cst_39 {dimension_numbers = #tpu.dot_dimension_numbers<[1], [0], [0], [1], [0, 0, 1, 1], [], []>} : vector<128x4xf32>, vector<4x32xf32>, vector<128x32xf32> -> vector<128x32xf32>
    %83 = arith.mulf %82, %80 : vector<128x32xf32>
    %c0_40 = arith.constant 0 : index
    %c0_41 = arith.constant 0 : index
    %84 = vector.load %arg9[%c0_40, %c0_41] : memref<4x32xf32, #tpu.memory_space<vmem>>, vector<4x32xf32>
    %cst_42 = arith.constant dense<0.000000e+00> : vector<16x32xf32>
    %85 = tpu.matmul %67, %84, %cst_42 {dimension_numbers = #tpu.dot_dimension_numbers<[1], [0], [0], [1], [0, 0, 1, 1], [], []>} : vector<16x4xf32>, vector<4x32xf32>, vector<16x32xf32> -> vector<16x32xf32>
    %c0_43 = arith.constant 0 : index
    %c0_44 = arith.constant 0 : index
    %86 = vector.load %arg16[%c0_43, %c0_44] : memref<16x32xf32, #tpu.memory_space<vmem>>, vector<16x32xf32>
    %87 = arith.mulf %85, %86 : vector<16x32xf32>
    %88 = arith.truncf %14 : vector<16x128xf32> to vector<16x128xbf16>
    %89 = arith.truncf %83 : vector<128x32xf32> to vector<128x32xbf16>
    %cst_45 = arith.constant dense<0.000000e+00> : vector<16x32xf32>
    %90 = tpu.matmul %88, %89, %cst_45 {dimension_numbers = #tpu.dot_dimension_numbers<[1], [0], [0], [1], [0, 0, 1, 1], [], []>} : vector<16x128xbf16>, vector<128x32xbf16>, vector<16x32xf32> -> vector<16x32xf32>
    %91 = arith.addf %87, %90 : vector<16x32xf32>
    %c0_46 = arith.constant 0 : index
    %c0_47 = arith.constant 0 : index
    %92 = vector.load %arg16[%c0_46, %c0_47] : memref<16x32xf32, #tpu.memory_space<vmem>>, vector<16x32xf32>
    tpu.vector_store %arg16[%c0_46, %c0_47], %91 {strides = array<i32>} : memref<16x32xf32, #tpu.memory_space<vmem>>, vector<16x32xf32>,
    %c1_i32 = arith.constant 1 : i32
    %93 = arith.cmpi eq, %arg0, %c1_i32 : i32
    %94 = arith.extui %93 : i1 to i32
    %c0_i32_48 = arith.constant 0 : i32
    %95 = arith.cmpi ne, %94, %c0_i32_48 : i32
    scf.if %95 {
      %c0_49 = arith.constant 0 : index
      %c0_50 = arith.constant 0 : index
      %96 = vector.load %arg15[%c0_49, %c0_50] : memref<16x4xf32, #tpu.memory_space<vmem>>, vector<16x4xf32>
      %c0_51 = arith.constant 0 : index
      %c0_52 = arith.constant 0 : index
      %97 = vector.load %arg9[%c0_51, %c0_52] : memref<4x32xf32, #tpu.memory_space<vmem>>, vector<4x32xf32>
      %cst_53 = arith.constant dense<0.000000e+00> : vector<16x32xf32>
      %98 = tpu.matmul %96, %97, %cst_53 {dimension_numbers = #tpu.dot_dimension_numbers<[1], [0], [0], [1], [0, 0, 1, 1], [], []>} : vector<16x4xf32>, vector<4x32xf32>, vector<16x32xf32> -> vector<16x32xf32>
      %cst_54 = arith.constant 0.000000e+00 : f32
      %99 = vector.broadcast %cst_54 : f32 to vector<16x32xf32>
      %100 = arith.cmpf ogt, %98, %99 : vector<16x32xf32>
      %cst_55 = arith.constant 1.000000e+00 : f32
      %101 = vector.broadcast %cst_55 : f32 to vector<16x32xf32>
      %102 = arith.select %100, %98, %101 : vector<16x32xi1>, vector<16x32xf32>
      %c0_56 = arith.constant 0 : index
      %c0_57 = arith.constant 0 : index
      %103 = vector.load %arg16[%c0_56, %c0_57] : memref<16x32xf32, #tpu.memory_space<vmem>>, vector<16x32xf32>
      %104 = tpu.reciprocal %102 : vector<16x32xf32> -> vector<16x32xf32>
      %105 = arith.mulf %103, %104 : vector<16x32xf32>
      %c0_58 = arith.constant 0 : index
      %c0_59 = arith.constant 0 : index
      %106 = vector.load %arg11[%c0_58, %c0_59] : memref<16x32xf32, #tpu.memory_space<vmem>>, vector<16x32xf32>
      %107 = arith.addf %105, %106 : vector<16x32xf32>
      %cst_60 = arith.constant 0.000000e+00 : f32
      %108 = vector.broadcast %cst_60 : f32 to vector<16x32xf32>
      %109 = arith.cmpf ogt, %107, %108 : vector<16x32xf32>
      %cst_61 = arith.constant 0.000000e+00 : f32
      %110 = vector.broadcast %cst_61 : f32 to vector<16x32xf32>
      %111 = arith.minimumf %107, %110 : vector<16x32xf32>
      %112 = math.exp %111 : vector<16x32xf32>
      %cst_62 = arith.constant 1.000000e+00 : f32
      %113 = vector.broadcast %cst_62 : f32 to vector<16x32xf32>
      %114 = arith.subf %112, %113 : vector<16x32xf32>
      %115 = arith.select %109, %107, %114 : vector<16x32xi1>, vector<16x32xf32>
      %c0_63 = arith.constant 0 : index
      %c0_64 = arith.constant 0 : index
      %116 = vector.load %arg10[%c0_63, %c0_64] : memref<16x32xf32, #tpu.memory_space<vmem>>, vector<16x32xf32>
      tpu.vector_store %arg10[%c0_63, %c0_64], %115 {strides = array<i32>} : memref<16x32xf32, #tpu.memory_space<vmem>>, vector<16x32xf32>,
    } else {
    }
    return
  }
  func.func @transform_0(%arg0: i32) -> (i32, i32) {
    %c0_i32 = arith.constant 0 : i32
    %c0_i32_0 = arith.constant 0 : i32
    return %c0_i32, %arg0 : i32, i32
  }
  func.func @transform_1(%arg0: i32) -> (i32, i32) {
    %c0_i32 = arith.constant 0 : i32
    %c0_i32_0 = arith.constant 0 : i32
    return %c0_i32, %arg0 : i32, i32
  }
  func.func @transform_2(%arg0: i32) -> (i32, i32) {
    %c0_i32 = arith.constant 0 : i32
    %c0_i32_0 = arith.constant 0 : i32
    return %arg0, %c0_i32 : i32, i32
  }
  func.func @transform_3(%arg0: i32) -> (i32, i32) {
    %c0_i32 = arith.constant 0 : i32
    %c0_i32_0 = arith.constant 0 : i32
    %c0_i32_1 = arith.constant 0 : i32
    return %c0_i32, %c0_i32_0 : i32, i32
  }
  func.func @transform_4(%arg0: i32) -> (i32, i32) {
    %c0_i32 = arith.constant 0 : i32
    %c0_i32_0 = arith.constant 0 : i32
    %c0_i32_1 = arith.constant 0 : i32
    return %c0_i32, %c0_i32_0 : i32, i32
  }
  func.func @transform_5(%arg0: i32) -> (i32, i32) {
    %c0_i32 = arith.constant 0 : i32
    %c0_i32_0 = arith.constant 0 : i32
    %c0_i32_1 = arith.constant 0 : i32
    return %c0_i32, %c0_i32_0 : i32, i32
  }
  func.func @transform_6(%arg0: i32) -> (i32, i32) {
    %c0_i32 = arith.constant 0 : i32
    %c0_i32_0 = arith.constant 0 : i32
    %c0_i32_1 = arith.constant 0 : i32
    return %c0_i32, %c0_i32_0 : i32, i32
  }
  func.func @transform_7(%arg0: i32) -> (i32, i32) {
    %c0_i32 = arith.constant 0 : i32
    %c0_i32_0 = arith.constant 0 : i32
    %c0_i32_1 = arith.constant 0 : i32
    return %c0_i32, %c0_i32_0 : i32, i32
  }
  func.func @transform_8(%arg0: i32) -> (i32, i32) {
    %c0_i32 = arith.constant 0 : i32
    %c0_i32_0 = arith.constant 0 : i32
    %c0_i32_1 = arith.constant 0 : i32
    return %c0_i32, %c0_i32_0 : i32, i32
  }
  func.func @transform_9(%arg0: i32) -> (i32, i32) {
    %c0_i32 = arith.constant 0 : i32
    %c0_i32_0 = arith.constant 0 : i32
    %c0_i32_1 = arith.constant 0 : i32
    return %c0_i32, %c0_i32_0 : i32, i32
  }
}

</mosaic_0001>

<llo_original>
// kernel: tpu_custom_call.1
$region0: #{tpu_custom_call.1}
  #allocation0 [shape = 'u32[]', space=smem, size = 0x4, offset = 0x4, fixed_abs, tag = 'smem constant byte address 0x4 - core index']
  #allocation1 [shape = 'u32[144,128]{1,0:T(1,128)}', space=vmem, size = 0x12000, scoped, tag = 'internal scratch']
  #allocation2 [shape = 'f32[16,32]{1,0:T(8,128)}', space=vmem, size = 0x2000, scoped, tag = 'scratch operand']
  #allocation3 [shape = 'f32[4,16]{1,0:T(4,128)}', space=vmem, size = 0x800, scoped, tag = 'scratch operand']
  #allocation4 [shape = 'f32[4,16]{1,0:T(4,128)}', space=vmem, size = 0x800, scoped, tag = 'scratch operand']
  #allocation5 [shape = 'f32[16,4]{1,0:T(8,128)}', space=vmem, size = 0x2000, scoped, tag = 'scratch operand']
  #allocation6 [shape = 'f32[16,4]{1,0:T(8,128)}', space=vmem, size = 0x2000, scoped, tag = 'scratch operand']
  #allocation7 [shape = 'f32[16,32]{1,0:T(8,128)}', space=vmem, size = 0x2000, scoped, tag = 'scratch operand']
  %s0 = inlined_call_operand.vmem [shape: s32[1,256], index: 0, kind: input, shape index: {}]
  %s1 = inlined_call_operand.vmem [shape: s32[1,256], index: 1, kind: input, shape index: {}]
  %s2 = inlined_call_operand.vmem [shape: s32[256,1], index: 2, kind: input, shape index: {}]
  %s3 = inlined_call_operand.vmem [shape: f32[16,16], index: 3, kind: input, shape index: {}]
  %s4 = inlined_call_operand.vmem [shape: f32[16,32], index: 4, kind: input, shape index: {}]
  %s5 = inlined_call_operand.vmem [shape: f32[1,32], index: 5, kind: input, shape index: {}]
  %s6 = inlined_call_operand.vmem [shape: f32[32,8], index: 6, kind: input, shape index: {}]
  %s7 = inlined_call_operand.vmem [shape: f32[4,1], index: 7, kind: input, shape index: {}]
  %s8 = inlined_call_operand.vmem [shape: f32[4,32], index: 8, kind: input, shape index: {}]
  %s9 = inlined_call_operand.hbm [shape: f32[16,32], index: 9, kind: output, shape index: {}]
  %s10 = sld [smem:[#allocation0]]
  $region77: #{tpu_custom_call.1} parent=0
    _
  %s12 = ssub.s32 1, %s10
  %s13 = scalar_select 0, %s12, %s10
  $region1: #{tpu_custom_call.1} parent=0
    #allocation8 [shape = 'u8[8192]{0}', space=vmem, size = 0x2000, scoped, tag = 'output window, operand 0, single buffered']
    #allocation9 [shape = 's32[2]{0}', space=sflag, size = 0x8, scoped, tag = 'scoped memory for tpu_custom_call.1']
    %14 = vsyncpa [#allocation9], 0
    loop: start=0, step=1, limit=4
    $region2: #{tpu_custom_call.1} parent=1 // loop_pre_header
      _
    $region3: #{tpu_custom_call.1} parent=1 // loop_header
      %s16 = sphi 0, %s20
      %p17 = scmp.ge.s32.totalorder %s16, 4
      %s26 = sphi 0, %s28
      %s29 = sphi 0, %s26
      %s30 = sphi 0, %s29
      %s46 = sphi 0, %s30
      %s52 = sphi 0, %s54
      %s55 = sphi 0, %s52
      %s56 = sphi 0, %s55
      %s72 = sphi 0, %s56
      %s78 = sphi 0, %s80
      %s81 = sphi 0, %s78
      %s82 = sphi 0, %s81
      %s98 = sphi 0, %s82
      %s102 = sphi 0, %s102
      %s104 = sphi 0, %s102
      %s105 = sphi 0, %s104
      %s119 = sphi 0, %s105
      %s123 = sphi 0, %s123
      %s125 = sphi 0, %s123
      %s126 = sphi 0, %s125
      %s140 = sphi 0, %s126
      %s144 = sphi 0, %s144
      %s146 = sphi 0, %s144
      %s147 = sphi 0, %s146
      %s161 = sphi 0, %s147
      %s165 = sphi 0, %s165
      %s167 = sphi 0, %s165
      %s168 = sphi 0, %s167
      %s182 = sphi 0, %s168
      %s186 = sphi 0, %s186
      %s188 = sphi 0, %s186
      %s189 = sphi 0, %s188
      %s203 = sphi 0, %s189
      %s207 = sphi 0, %s207
      %s209 = sphi 0, %s207
      %s210 = sphi 0, %s209
      %s224 = sphi 0, %s210
      %s228 = sphi 0, %s228
      %s230 = sphi 0, %s228
      %s231 = sphi 0, %s230
      %s245 = sphi 0, %s231
    $region4: #{tpu_custom_call.1} parent=1 // loop_header_branch
      %19 = sbr.rel (%p17) target = $region8
    $region5: #{tpu_custom_call.1} parent=1 // loop_body
      %s21 = ssub.s32 %s16, 1
      %s22 = ssub.s32 %s16, 2
      %s23 = sadd.s32 %s16, 1
      %s24 = ssub.s32 %s16, %s23
      %p25 = scmp.eq.s32.totalorder %s24, 0
      %s27 = sadd.s32 %s26, 1
      %s28 = scalar_select %p25, %s26, %s27
      %p31 = pneg %p25
      %p32 = scmp.eq.s32.totalorder %s16, 1
      %p33 = por %p31, %p32
      %p34 = scmp.ne.s32.totalorder %s26, %s29
      %p35 = scmp.eq.s32.totalorder %s16, 0
      %p36 = por %p34, %p35
      %p37 = scmp.ne.s32.totalorder %s26, %s29
      %p38 = scmp.eq.s32.totalorder %s21, 1
      %p39 = por %p37, %p38
      %p40 = scmp.ne.s32.totalorder %s29, %s30
      %p41 = scmp.eq.s32.totalorder %s21, 0
      %p42 = por %p40, %p41
      %p43 = scmp.ne.s32.totalorder %s29, %s30
      %p44 = scmp.eq.s32.totalorder %s22, 1
      %p45 = por %p43, %p44
      %p47 = scmp.ne.s32.totalorder %s30, %s46
      %p48 = scmp.eq.s32.totalorder %s22, 0
      %p49 = por %p47, %p48
      %s50 = ssub.s32 %s16, %s23
      %p51 = scmp.eq.s32.totalorder %s50, 0
      %s53 = sadd.s32 %s52, 1
      %s54 = scalar_select %p51, %s52, %s53
      %p57 = pneg %p51
      %p58 = scmp.eq.s32.totalorder %s16, 1
      %p59 = por %p57, %p58
      %p60 = scmp.ne.s32.totalorder %s52, %s55
      %p61 = scmp.eq.s32.totalorder %s16, 0
      %p62 = por %p60, %p61
      %p63 = scmp.ne.s32.totalorder %s52, %s55
      %p64 = scmp.eq.s32.totalorder %s21, 1
      %p65 = por %p63, %p64
      %p66 = scmp.ne.s32.totalorder %s55, %s56
      %p67 = scmp.eq.s32.totalorder %s21, 0
      %p68 = por %p66, %p67
      %p69 = scmp.ne.s32.totalorder %s55, %s56
      %p70 = scmp.eq.s32.totalorder %s22, 1
      %p71 = por %p69, %p70
      %p73 = scmp.ne.s32.totalorder %s56, %s72
      %p74 = scmp.eq.s32.totalorder %s22, 0
      %p75 = por %p73, %p74
      %s76 = ssub.s32 %s16, %s23
      %p77 = scmp.eq.s32.totalorder %s76, 0
      %s79 = sadd.s32 %s78, 1
      %s80 = scalar_select %p77, %s78, %s79
      %p83 = pneg %p77
      %p84 = scmp.eq.s32.totalorder %s16, 1
      %p85 = por %p83, %p84
      %p86 = scmp.ne.s32.totalorder %s78, %s81
      %p87 = scmp.eq.s32.totalorder %s16, 0
      %p88 = por %p86, %p87
      %p89 = scmp.ne.s32.totalorder %s78, %s81
      %p90 = scmp.eq.s32.totalorder %s21, 1
      %p91 = por %p89, %p90
      %p92 = scmp.ne.s32.totalorder %s81, %s82
      %p93 = scmp.eq.s32.totalorder %s21, 0
      %p94 = por %p92, %p93
      %p95 = scmp.ne.s32.totalorder %s81, %s82
      %p96 = scmp.eq.s32.totalorder %s22, 1
      %p97 = por %p95, %p96
      %p99 = scmp.ne.s32.totalorder %s82, %s98
      %p100 = scmp.eq.s32.totalorder %s22, 0
      %p101 = por %p99, %p100
      %s103 = sadd.s32 %s102, 1
      %p106 = scmp.eq.s32.totalorder %s16, 1
      %p107 = scmp.ne.s32.totalorder %s102, %s104
      %p108 = scmp.eq.s32.totalorder %s16, 0
      %p109 = por %p107, %p108
      %p110 = scmp.ne.s32.totalorder %s102, %s104
      %p111 = scmp.eq.s32.totalorder %s21, 1
      %p112 = por %p110, %p111
      %p113 = scmp.ne.s32.totalorder %s104, %s105
      %p114 = scmp.eq.s32.totalorder %s21, 0
      %p115 = por %p113, %p114
      %p116 = scmp.ne.s32.totalorder %s104, %s105
      %p117 = scmp.eq.s32.totalorder %s22, 1
      %p118 = por %p116, %p117
      %p120 = scmp.ne.s32.totalorder %s105, %s119
      %p121 = scmp.eq.s32.totalorder %s22, 0
      %p122 = por %p120, %p121
      %s124 = sadd.s32 %s123, 1
      %p127 = scmp.eq.s32.totalorder %s16, 1
      %p128 = scmp.ne.s32.totalorder %s123, %s125
      %p129 = scmp.eq.s32.totalorder %s16, 0
      %p130 = por %p128, %p129
      %p131 = scmp.ne.s32.totalorder %s123, %s125
      %p132 = scmp.eq.s32.totalorder %s21, 1
      %p133 = por %p131, %p132
      %p134 = scmp.ne.s32.totalorder %s125, %s126
      %p135 = scmp.eq.s32.totalorder %s21, 0
      %p136 = por %p134, %p135
      %p137 = scmp.ne.s32.totalorder %s125, %s126
      %p138 = scmp.eq.s32.totalorder %s22, 1
      %p139 = por %p137, %p138
      %p141 = scmp.ne.s32.totalorder %s126, %s140
      %p142 = scmp.eq.s32.totalorder %s22, 0
      %p143 = por %p141, %p142
      %s145 = sadd.s32 %s144, 1
      %p148 = scmp.eq.s32.totalorder %s16, 1
      %p149 = scmp.ne.s32.totalorder %s144, %s146
      %p150 = scmp.eq.s32.totalorder %s16, 0
      %p151 = por %p149, %p150
      %p152 = scmp.ne.s32.totalorder %s144, %s146
      %p153 = scmp.eq.s32.totalorder %s21, 1
      %p154 = por %p152, %p153
      %p155 = scmp.ne.s32.totalorder %s146, %s147
      %p156 = scmp.eq.s32.totalorder %s21, 0
      %p157 = por %p155, %p156
      %p158 = scmp.ne.s32.totalorder %s146, %s147
      %p159 = scmp.eq.s32.totalorder %s22, 1
      %p160 = por %p158, %p159
      %p162 = scmp.ne.s32.totalorder %s147, %s161
      %p163 = scmp.eq.s32.totalorder %s22, 0
      %p164 = por %p162, %p163
      %s166 = sadd.s32 %s165, 1
      %p169 = scmp.eq.s32.totalorder %s16, 1
      %p170 = scmp.ne.s32.totalorder %s165, %s167
      %p171 = scmp.eq.s32.totalorder %s16, 0
      %p172 = por %p170, %p171
      %p173 = scmp.ne.s32.totalorder %s165, %s167
      %p174 = scmp.eq.s32.totalorder %s21, 1
      %p175 = por %p173, %p174
      %p176 = scmp.ne.s32.totalorder %s167, %s168
      %p177 = scmp.eq.s32.totalorder %s21, 0
      %p178 = por %p176, %p177
      %p179 = scmp.ne.s32.totalorder %s167, %s168
      %p180 = scmp.eq.s32.totalorder %s22, 1
      %p181 = por %p179, %p180
      %p183 = scmp.ne.s32.totalorder %s168, %s182
      %p184 = scmp.eq.s32.totalorder %s22, 0
      %p185 = por %p183, %p184
      %s187 = sadd.s32 %s186, 1
      %p190 = scmp.eq.s32.totalorder %s16, 1
      %p191 = scmp.ne.s32.totalorder %s186, %s188
      %p192 = scmp.eq.s32.totalorder %s16, 0
      %p193 = por %p191, %p192
      %p194 = scmp.ne.s32.totalorder %s186, %s188
      %p195 = scmp.eq.s32.totalorder %s21, 1
      %p196 = por %p194, %p195
      %p197 = scmp.ne.s32.totalorder %s188, %s189
      %p198 = scmp.eq.s32.totalorder %s21, 0
      %p199 = por %p197, %p198
      %p200 = scmp.ne.s32.totalorder %s188, %s189
      %p201 = scmp.eq.s32.totalorder %s22, 1
      %p202 = por %p200, %p201
      %p204 = scmp.ne.s32.totalorder %s189, %s203
      %p205 = scmp.eq.s32.totalorder %s22, 0
      %p206 = por %p204, %p205
      %s208 = sadd.s32 %s207, 1
      %p211 = scmp.eq.s32.totalorder %s16, 1
      %p212 = scmp.ne.s32.totalorder %s207, %s209
      %p213 = scmp.eq.s32.totalorder %s16, 0
      %p214 = por %p212, %p213
      %p215 = scmp.ne.s32.totalorder %s207, %s209
      %p216 = scmp.eq.s32.totalorder %s21, 1
      %p217 = por %p215, %p216
      %p218 = scmp.ne.s32.totalorder %s209, %s210
      %p219 = scmp.eq.s32.totalorder %s21, 0
      %p220 = por %p218, %p219
      %p221 = scmp.ne.s32.totalorder %s209, %s210
      %p222 = scmp.eq.s32.totalorder %s22, 1
      %p223 = por %p221, %p222
      %p225 = scmp.ne.s32.totalorder %s210, %s224
      %p226 = scmp.eq.s32.totalorder %s22, 0
      %p227 = por %p225, %p226
      %s229 = sadd.s32 %s228, 1
      %p232 = scmp.eq.s32.totalorder %s16, 1
      %p233 = scmp.ne.s32.totalorder %s228, %s230
      %p234 = scmp.eq.s32.totalorder %s16, 0
      %p235 = por %p233, %p234
      %p236 = scmp.ne.s32.totalorder %s228, %s230
      %p237 = scmp.eq.s32.totalorder %s21, 1
      %p238 = por %p236, %p237
      %p239 = scmp.ne.s32.totalorder %s230, %s231
      %p240 = scmp.eq.s32.totalorder %s21, 0
      %p241 = por %p239, %p240
      %p242 = scmp.ne.s32.totalorder %s230, %s231
      %p243 = scmp.eq.s32.totalorder %s22, 1
      %p244 = por %p242, %p243
      %p246 = scmp.ne.s32.totalorder %s231, %s245
      %p247 = scmp.eq.s32.totalorder %s22, 0
      %p248 = por %p246, %p247
      %p249 = scmp.le.s32.totalorder 1, %s16
      %p250 = scmp.lt.s32.totalorder %s16, 3
      %p251 = pnand %p249, %p250
      %p252 = pneg %p251
      // Predicated region
      $region9: #{tpu_custom_call.1} parent=5 // pred_check
        _
      $region10: #{tpu_custom_call.1} parent=5 // pred_check_branch
        %254 = sbr.rel (%p251) target = $region12
      $region11: #{tpu_custom_call.1} parent=5 // pred_region
        %s255 = ssub.s32 %s16, 1
        // Predicated region
        $region13: #{tpu_custom_call.1} parent=11 // pred_check
          %p256 = pneg %p115
        $region14: #{tpu_custom_call.1} parent=11 // pred_check_branch
          %258 = sbr.rel (%p256) target = $region16
        $region15: #{tpu_custom_call.1} parent=11 // pred_region
          _
        $region16: #{tpu_custom_call.1} parent=11 // pred_fallthru
          _
        // Predicated region
        $region17: #{tpu_custom_call.1} parent=11 // pred_check
          %p259 = pneg %p136
        $region18: #{tpu_custom_call.1} parent=11 // pred_check_branch
          %261 = sbr.rel (%p259) target = $region20
        $region19: #{tpu_custom_call.1} parent=11 // pred_region
          _
        $region20: #{tpu_custom_call.1} parent=11 // pred_fallthru
          _
        // Predicated region
        $region21: #{tpu_custom_call.1} parent=11 // pred_check
          %p262 = pneg %p157
        $region22: #{tpu_custom_call.1} parent=11 // pred_check_branch
          %264 = sbr.rel (%p262) target = $region24
        $region23: #{tpu_custom_call.1} parent=11 // pred_region
          _
        $region24: #{tpu_custom_call.1} parent=11 // pred_fallthru
          _
        // Predicated region
        $region25: #{tpu_custom_call.1} parent=11 // pred_check
          %p265 = pneg %p178
        $region26: #{tpu_custom_call.1} parent=11 // pred_check_branch
          %267 = sbr.rel (%p265) target = $region28
        $region27: #{tpu_custom_call.1} parent=11 // pred_region
          _
        $region28: #{tpu_custom_call.1} parent=11 // pred_fallthru
          _
        // Predicated region
        $region29: #{tpu_custom_call.1} parent=11 // pred_check
          %p268 = pneg %p199
        $region30: #{tpu_custom_call.1} parent=11 // pred_check_branch
          %270 = sbr.rel (%p268) target = $region32
        $region31: #{tpu_custom_call.1} parent=11 // pred_region
          _
        $region32: #{tpu_custom_call.1} parent=11 // pred_fallthru
          _
        // Predicated region
        $region33: #{tpu_custom_call.1} parent=11 // pred_check
          %p271 = pneg %p220
        $region34: #{tpu_custom_call.1} parent=11 // pred_check_branch
          %273 = sbr.rel (%p271) target = $region36
        $region35: #{tpu_custom_call.1} parent=11 // pred_region
          _
        $region36: #{tpu_custom_call.1} parent=11 // pred_fallthru
          _
      $region12: #{tpu_custom_call.1} parent=5 // pred_fallthru
        _
      %p274 = scmp.lt.s32.totalorder %s16, 2
      // Predicated region
      $region37: #{tpu_custom_call.1} parent=5 // pred_check
        %p275 = pneg %p274
      $region38: #{tpu_custom_call.1} parent=5 // pred_check_branch
        %277 = sbr.rel (%p275) target = $region40
      $region39: #{tpu_custom_call.1} parent=5 // pred_region
        // Predicated region
        $region41: #{tpu_custom_call.1} parent=39 // pred_check
          %p278 = pneg %p36
        $region42: #{tpu_custom_call.1} parent=39 // pred_check_branch
          %280 = sbr.rel (%p278) target = $region44
        $region43: #{tpu_custom_call.1} parent=39 // pred_region
          %p281 = scmp.lt.s32.totalorder %s16, 1
          %s282 = scalar_select %p281, %s16, 1
          %s283 = scalar_lea.vmem %s0, %s282
        $region44: #{tpu_custom_call.1} parent=39 // pred_fallthru
          _
        // Predicated region
        $region45: #{tpu_custom_call.1} parent=39 // pred_check
          %p284 = pneg %p62
        $region46: #{tpu_custom_call.1} parent=39 // pred_check_branch
          %286 = sbr.rel (%p284) target = $region48
        $region47: #{tpu_custom_call.1} parent=39 // pred_region
          %p287 = scmp.lt.s32.totalorder %s16, 1
          %s288 = scalar_select %p287, %s16, 1
          %s289 = scalar_lea.vmem %s1, %s288
        $region48: #{tpu_custom_call.1} parent=39 // pred_fallthru
          _
        // Predicated region
        $region49: #{tpu_custom_call.1} parent=39 // pred_check
          %p290 = pneg %p88
        $region50: #{tpu_custom_call.1} parent=39 // pred_check_branch
          %292 = sbr.rel (%p290) target = $region52
        $region51: #{tpu_custom_call.1} parent=39 // pred_region
          %s293 = smul.u32 16, %s16
          %p294 = scmp.lt.s32.totalorder %s293, 31
          %s295 = scalar_select %p294, %s293, 31
          %s296 = smul.addr %s295, 8
          %s297 = scalar_lea.vmem %s2, %s296
          %s298 = smul.u32 16, %s16
        $region52: #{tpu_custom_call.1} parent=39 // pred_fallthru
          _
      $region40: #{tpu_custom_call.1} parent=5 // pred_fallthru
        _
      %p299 = scmp.le.s32.totalorder 1, %s16
      %p300 = scmp.lt.s32.totalorder %s16, 3
      %p301 = pnand %p299, %p300
      %p302 = pneg %p301
      // Predicated region
      $region53: #{tpu_custom_call.1} parent=5 // pred_check
        _
      $region54: #{tpu_custom_call.1} parent=5 // pred_check_branch
        %304 = sbr.rel (%p301) target = $region56
      $region55: #{tpu_custom_call.1} parent=5 // pred_region
        %s305 = ssub.s32 %s16, 1
        %p306 = scmp.lt.s32.totalorder %s21, 1
        %s307 = scalar_select %p306, %s21, 1
        %s308 = scalar_lea.vmem %s0, %s307
        %p309 = pneg %p42
        %p310 = pneg %p39
        %p311 = scmp.lt.s32.totalorder %s21, 1
        %s312 = scalar_select %p311, %s21, 1
        %s313 = scalar_lea.vmem %s1, %s312
        %p314 = pneg %p68
        %p315 = pneg %p65
        %s316 = smul.u32 16, %s21
        %p317 = scmp.lt.s32.totalorder %s316, 31
        %s318 = scalar_select %p317, %s316, 31
        %s319 = smul.addr %s318, 8
        %s320 = scalar_lea.vmem %s2, %s319
        %p321 = pneg %p94
        %p322 = pneg %p91
        %p323 = pneg %p115
        %p324 = pneg %p112
        %p325 = pneg %p136
        %p326 = pneg %p133
        %p327 = pneg %p157
        %p328 = pneg %p154
        %p329 = pneg %p178
        %p330 = pneg %p175
        %p331 = pneg %p199
        %p332 = pneg %p196
        %p333 = pneg %p220
        %p334 = pneg %p217
        %p335 = pneg %p241
        %p336 = pneg %p238
        %p337 = scmp.lt.s32.totalorder %s21, 1
        %s338 = scalar_select %p337, %s21, 1
        %s339 = scalar_lea.vmem %s0, %s338
        %p340 = scmp.lt.s32.totalorder %s21, 1
        %s341 = scalar_select %p340, %s21, 1
        %s342 = scalar_lea.vmem %s1, %s341
        %s343 = smul.u32 16, %s21
        %p344 = scmp.lt.s32.totalorder %s343, 31
        %s345 = scalar_select %p344, %s343, 31
        %s346 = smul.addr %s345, 8
        %s347 = scalar_lea.vmem %s2, %s346
        %s348 = smul.u32 16, %s21
        %p350 = scmp.eq.s32.totalorder %s21, 0
        // Predicated region
        $region57: #{tpu_custom_call.1} parent=55 // pred_check
          %p351 = pneg %p350
        $region58: #{tpu_custom_call.1} parent=55 // pred_check_branch
          %353 = sbr.rel (%p351) target = $region60
        $region59: #{tpu_custom_call.1} parent=55 // pred_region
          %v354 = vld [vmem:[%s3] sm:$0xff]
          %v355 = vld [vmem:[%s3 + $0x8] sm:$0xff]
          %v356 = vld [vmem:[%s4] sm:$0xff]
          %v357 = vld [vmem:[%s4 + $0x8] sm:$0xff]
          %v358 = vld [vmem:[%s5] sm:$0x1]
          %v360 = vlaneseq
          %v361 = vshrl.u32 %v360, 7
          %v362 = vsub.s32 0, %v361
          %v363 = vrot.slane %v358, %v362
          %vm365 = vcmask 130048
          %v367 = vsel %vm365, %v354, 0
          %v370 = vsel %vm365, %v355, 0
          %372 = vmatprep.subr.mxu0 0.0
          %373 = vmatpush1.msra.mxu0 %v356
          %374 = vmatprep.subr.mxu0 0.0
          %375 = vmatpush1.msra.mxu0 %v357
          %376 = vmatprep.subr.mxu0 0.0
          %377 = vmatpush1.msra.mxu0 0.0
          %378 = vmatprep.subr.mxu0 0.0
          %379 = vmatpush1.msra.mxu0 0.0
          %380 = vmatprep.subr.mxu0 0.0
          %381 = vmatpush1.msra.mxu0 0.0
          %382 = vmatprep.subr.mxu0 0.0
          %383 = vmatpush1.msra.mxu0 0.0
          %384 = vmatprep.subr.mxu0 0.0
          %385 = vmatpush1.msra.mxu0 0.0
          %386 = vmatprep.subr.mxu0 0.0
          %387 = vmatpush1.msra.mxu0 0.0
          %388 = vmatprep.subr.mxu0 0.0
          %389 = vmatpush1.msra.mxu0 0.0
          %390 = vmatprep.subr.mxu0 0.0
          %391 = vmatpush1.msra.mxu0 0.0
          %392 = vmatprep.subr.mxu0 0.0
          %393 = vmatpush1.msra.mxu0 0.0
          %394 = vmatprep.subr.mxu0 0.0
          %395 = vmatpush1.msra.mxu0 0.0
          %396 = vmatprep.subr.mxu0 0.0
          %397 = vmatpush1.msra.mxu0 0.0
          %398 = vmatprep.subr.mxu0 0.0
          %399 = vmatpush1.msra.mxu0 0.0
          %400 = vmatprep.subr.mxu0 0.0
          %401 = vmatpush1.msra.mxu0 0.0
          %402 = vmatprep.subr.mxu0 0.0
          %403 = vmatpush1.msra.mxu0 0.0
          %404 = vmatprep.subr.mxu0 0.0
          %405 = vmatpush1.msra.mxu0 0.0
          %406 = vmatprep.subr.mxu0 0.0
          %407 = vmatpush1.msra.mxu0 0.0
          %408 = vmatprep.subr.mxu0 0.0
          %409 = vmatpush1.msra.mxu0 0.0
          %410 = vmatprep.subr.mxu0 0.0
          %411 = vmatpush1.msra.mxu0 0.0
          %412 = vmatprep.subr.mxu0 0.0
          %413 = vmatpush1.msra.mxu0 0.0
          %414 = vmatprep.subr.mxu0 0.0
          %415 = vmatpush1.msra.mxu0 0.0
          %416 = vmatprep.subr.mxu0 0.0
          %417 = vmatpush1.msra.mxu0 0.0
          %418 = vmatprep.subr.mxu0 0.0
          %419 = vmatpush1.msra.mxu0 0.0
          %420 = vmatprep.subr.mxu0 0.0
          %421 = vmatpush1.msra.mxu0 0.0
          %422 = vmatprep.subr.mxu0 0.0
          %423 = vmatpush1.msra.mxu0 0.0
          %424 = vmatprep.subr.mxu0 0.0
          %425 = vmatpush1.msra.mxu0 0.0
          %426 = vmatprep.subr.mxu0 0.0
          %427 = vmatpush1.msra.mxu0 0.0
          %428 = vmatprep.subr.mxu0 0.0
          %429 = vmatpush1.msra.mxu0 0.0
          %430 = vmatprep.subr.mxu0 0.0
          %431 = vmatpush1.msra.mxu0 0.0
          %432 = vmatprep.subr.mxu0 0.0
          %433 = vmatpush1.msra.mxu0 0.0
          %434 = vmatprep.subr.mxu0 0.0
          %435 = vmatpush1.msra.mxu0 0.0
          %436 = vmatprep.mubr.f32.mxu0 0.0
          %437 = vmatmul.mubr.f32.gmra.mrb[0].mxu0 %v367
          %v438 = vpop.f32.mrb[0].mxu0
          %v439 = vadd.f32 %v363, %v438
          %v440 = vpop.f32.mrb[0].mxu0
          %441 = vmatprep.mubr.f32.mxu0 0.0
          %442 = vmatmul.mubr.f32.gmra.mrb[0].mxu0 %v370
          %v443 = vpop.f32.mrb[0].mxu0
          %v444 = vadd.f32 %v363, %v443
          %v445 = vpop.f32.mrb[0].mxu0
          %446 = vdwg.mxu0
          %vm447 = vcmask 261120
          %448 = vst.msk [vmem:[#allocation2] sm:$0xff] %vm447, %v439
          %449 = vst.msk [vmem:[#allocation2 + $0x8] sm:$0xff] %vm447, %v444
          %v450 = vld [vmem:[%s6] sm:$0xff]
          %v451 = vld [vmem:[%s6 + $0x8] sm:$0xff]
          %v452 = vld [vmem:[%s6 + $0x10] sm:$0xff]
          %v453 = vld [vmem:[%s6 + $0x18] sm:$0xff]
          %v455 = vsel %vm447, %v439, 0
          %v458 = vsel %vm447, %v444, 0
          %460 = vmatprep.subr.mxu0 0.0
          %461 = vmatpush1.msra.mxu0 %v450
          %462 = vmatprep.subr.mxu0 0.0
          %463 = vmatpush1.msra.mxu0 %v451
          %464 = vmatprep.subr.mxu0 0.0
          %465 = vmatpush1.msra.mxu0 %v452
          %466 = vmatprep.subr.mxu0 0.0
          %467 = vmatpush1.msra.mxu0 %v453
          %468 = vmatprep.subr.mxu0 0.0
          %469 = vmatpush1.msra.mxu0 0.0
          %470 = vmatprep.subr.mxu0 0.0
          %471 = vmatpush1.msra.mxu0 0.0
          %472 = vmatprep.subr.mxu0 0.0
          %473 = vmatpush1.msra.mxu0 0.0
          %474 = vmatprep.subr.mxu0 0.0
          %475 = vmatpush1.msra.mxu0 0.0
          %476 = vmatprep.subr.mxu0 0.0
          %477 = vmatpush1.msra.mxu0 0.0
          %478 = vmatprep.subr.mxu0 0.0
          %479 = vmatpush1.msra.mxu0 0.0
          %480 = vmatprep.subr.mxu0 0.0
          %481 = vmatpush1.msra.mxu0 0.0
          %482 = vmatprep.subr.mxu0 0.0
          %483 = vmatpush1.msra.mxu0 0.0
          %484 = vmatprep.subr.mxu0 0.0
          %485 = vmatpush1.msra.mxu0 0.0
          %486 = vmatprep.subr.mxu0 0.0
          %487 = vmatpush1.msra.mxu0 0.0
          %488 = vmatprep.subr.mxu0 0.0
          %489 = vmatpush1.msra.mxu0 0.0
          %490 = vmatprep.subr.mxu0 0.0
          %491 = vmatpush1.msra.mxu0 0.0
          %492 = vmatprep.subr.mxu0 0.0
          %493 = vmatpush1.msra.mxu0 0.0
          %494 = vmatprep.subr.mxu0 0.0
          %495 = vmatpush1.msra.mxu0 0.0
          %496 = vmatprep.subr.mxu0 0.0
          %497 = vmatpush1.msra.mxu0 0.0
          %498 = vmatprep.subr.mxu0 0.0
          %499 = vmatpush1.msra.mxu0 0.0
          %500 = vmatprep.subr.mxu0 0.0
          %501 = vmatpush1.msra.mxu0 0.0
          %502 = vmatprep.subr.mxu0 0.0
          %503 = vmatpush1.msra.mxu0 0.0
          %504 = vmatprep.subr.mxu0 0.0
          %505 = vmatpush1.msra.mxu0 0.0
          %506 = vmatprep.subr.mxu0 0.0
          %507 = vmatpush1.msra.mxu0 0.0
          %508 = vmatprep.subr.mxu0 0.0
          %509 = vmatpush1.msra.mxu0 0.0
          %510 = vmatprep.subr.mxu0 0.0
          %511 = vmatpush1.msra.mxu0 0.0
          %512 = vmatprep.subr.mxu0 0.0
          %513 = vmatpush1.msra.mxu0 0.0
          %514 = vmatprep.subr.mxu0 0.0
          %515 = vmatpush1.msra.mxu0 0.0
          %516 = vmatprep.subr.mxu0 0.0
          %517 = vmatpush1.msra.mxu0 0.0
          %518 = vmatprep.subr.mxu0 0.0
          %519 = vmatpush1.msra.mxu0 0.0
          %520 = vmatprep.subr.mxu0 0.0
          %521 = vmatpush1.msra.mxu0 0.0
          %522 = vmatprep.subr.mxu0 0.0
          %523 = vmatpush1.msra.mxu0 0.0
          %524 = vmatprep.mubr.f32.mxu0 0.0
          %525 = vmatmul.mubr.f32.gmra.mrb[0].mxu0 %v455
          %v526 = vpop.f32.mrb[0].mxu0
          %v527 = vadd.f32 0.0, %v526
          %v528 = vpop.f32.mrb[0].mxu0
          %529 = vmatprep.mubr.f32.mxu0 0.0
          %530 = vmatmul.mubr.f32.gmra.mrb[0].mxu0 %v458
          %v531 = vpop.f32.mrb[0].mxu0
          %v532 = vadd.f32 0.0, %v531
          %v533 = vpop.f32.mrb[0].mxu0
          %534 = vdwg.mxu0
          %535 = vxpose.xlu0.b32.start [1/16] %v527, 128
          %536 = vxpose.xlu0.b32.cont [2/16] %v532, 128
          %537 = vxpose.xlu0.b32.cont [3/16] 0.0, 128
          %538 = vxpose.xlu0.b32.cont [4/16] 0.0, 128
          %539 = vxpose.xlu0.b32.cont [5/16] 0.0, 128
          %540 = vxpose.xlu0.b32.cont [6/16] 0.0, 128
          %541 = vxpose.xlu0.b32.cont [7/16] 0.0, 128
          %542 = vxpose.xlu0.b32.cont [8/16] 0.0, 128
          %543 = vxpose.xlu0.b32.cont [9/16] 0.0, 128
          %544 = vxpose.xlu0.b32.cont [10/16] 0.0, 128
          %545 = vxpose.xlu0.b32.cont [11/16] 0.0, 128
          %546 = vxpose.xlu0.b32.cont [12/16] 0.0, 128
          %547 = vxpose.xlu0.b32.cont [13/16] 0.0, 128
          %548 = vxpose.xlu0.b32.cont [14/16] 0.0, 128
          %549 = vxpose.xlu0.b32.cont [15/16] 0.0, 128
          %550 = vxpose.xlu0.b32.end [16/16] 0.0, 128
          %v551 = vpop.trf.xlu0
          %v552 = vpop.trf.xlu0
          %v553 = vpop.trf.xlu0
          %v554 = vpop.trf.xlu0
          %v555 = vpop.trf.xlu0
          %v556 = vpop.trf.xlu0
          %v557 = vpop.trf.xlu0
          %v558 = vpop.trf.xlu0
          %v559 = vpop.trf.xlu0
          %v560 = vpop.trf.xlu0
          %v561 = vpop.trf.xlu0
          %v562 = vpop.trf.xlu0
          %v563 = vpop.trf.xlu0
          %v564 = vpop.trf.xlu0
          %v565 = vpop.trf.xlu0
          %v566 = vpop.trf.xlu0
          %vm567 = vcmask 125952
          %568 = vst.msk [vmem:[#allocation3] sm:$0xf] %vm567, %v551
          %571 = vrot.lane.b32.xlu0 %v527, 124
          %v572 = vpop.permute.xlu0 %571
          %573 = vrot.lane.b32.xlu0 %v532, 124
          %v574 = vpop.permute.xlu0 %573
          %577 = vxpose.xlu0.b32.start [1/16] %v572, 128
          %578 = vxpose.xlu0.b32.cont [2/16] %v574, 128
          %579 = vxpose.xlu0.b32.cont [3/16] 0.0, 128
          %580 = vxpose.xlu0.b32.cont [4/16] 0.0, 128
          %581 = vxpose.xlu0.b32.cont [5/16] 0.0, 128
          %582 = vxpose.xlu0.b32.cont [6/16] 0.0, 128
          %583 = vxpose.xlu0.b32.cont [7/16] 0.0, 128
          %584 = vxpose.xlu0.b32.cont [8/16] 0.0, 128
          %585 = vxpose.xlu0.b32.cont [9/16] 0.0, 128
          %586 = vxpose.xlu0.b32.cont [10/16] 0.0, 128
          %587 = vxpose.xlu0.b32.cont [11/16] 0.0, 128
          %588 = vxpose.xlu0.b32.cont [12/16] 0.0, 128
          %589 = vxpose.xlu0.b32.cont [13/16] 0.0, 128
          %590 = vxpose.xlu0.b32.cont [14/16] 0.0, 128
          %591 = vxpose.xlu0.b32.cont [15/16] 0.0, 128
          %592 = vxpose.xlu0.b32.end [16/16] 0.0, 128
          %v593 = vpop.trf.xlu0
          %v594 = vpop.trf.xlu0
          %v595 = vpop.trf.xlu0
          %v596 = vpop.trf.xlu0
          %v597 = vpop.trf.xlu0
          %v598 = vpop.trf.xlu0
          %v599 = vpop.trf.xlu0
          %v600 = vpop.trf.xlu0
          %v601 = vpop.trf.xlu0
          %v602 = vpop.trf.xlu0
          %v603 = vpop.trf.xlu0
          %v604 = vpop.trf.xlu0
          %v605 = vpop.trf.xlu0
          %v606 = vpop.trf.xlu0
          %v607 = vpop.trf.xlu0
          %v608 = vpop.trf.xlu0
          %609 = vst.msk [vmem:[#allocation4] sm:$0xf] %vm567, %v593
          %vm610 = vcmask 31744
          %611 = vst.msk [vmem:[#allocation5] sm:$0xff] %vm610, -1e+30
          %612 = vst.msk [vmem:[#allocation5 + $0x8] sm:$0xff] %vm610, -1e+30
          %613 = vst.msk [vmem:[#allocation6] sm:$0xff] %vm610, 0.0
          %614 = vst.msk [vmem:[#allocation6 + $0x8] sm:$0xff] %vm610, 0.0
          %615 = vst.msk [vmem:[#allocation7] sm:$0xff] %vm447, 0.0
          %616 = vst.msk [vmem:[#allocation7 + $0x8] sm:$0xff] %vm447, 0.0
        $region60: #{tpu_custom_call.1} parent=55 // pred_fallthru
          _
        %v617 = vld [vmem:[#allocation2] sm:$0xff]
        %v618 = vld [vmem:[#allocation2 + $0x8] sm:$0xff]
        %v619 = vld [vmem:[#allocation3] sm:$0xf]
        %v620 = vld [vmem:[#allocation4] sm:$0xf]
        %v621 = vld [vmem:[%s339] sm:$0x1]
        %v622 = vld [vmem:[%s342] sm:$0x1]
        %v623 = vld [vmem:[%s347] sm:$0xff]
        %v624 = vld [vmem:[%s347 + $0x8] sm:$0xff]
        %v625 = vld [vmem:[%s347 + $0x10] sm:$0xff]
        %v626 = vld [vmem:[%s347 + $0x18] sm:$0xff]
        %v627 = vld [vmem:[%s347 + $0x20] sm:$0xff]
        %v628 = vld [vmem:[%s347 + $0x28] sm:$0xff]
        %v629 = vld [vmem:[%s347 + $0x30] sm:$0xff]
        %v630 = vld [vmem:[%s347 + $0x38] sm:$0xff]
        %v631 = vld [vmem:[%s347 + $0x40] sm:$0xff]
        %v632 = vld [vmem:[%s347 + $0x48] sm:$0xff]
        %v633 = vld [vmem:[%s347 + $0x50] sm:$0xff]
        %v634 = vld [vmem:[%s347 + $0x58] sm:$0xff]
        %v635 = vld [vmem:[%s347 + $0x60] sm:$0xff]
        %v636 = vld [vmem:[%s347 + $0x68] sm:$0xff]
        %v637 = vld [vmem:[%s347 + $0x70] sm:$0xff]
        %v638 = vld [vmem:[%s347 + $0x78] sm:$0xff]
        %v639 = vlaneseq
        %v640 = vshrl.u32 %v639, 7
        %v641 = vadd.s32 %v640, 8
        %v642 = vlaneseq
        %v643 = vand.u32 %v642, 127
        %v644 = vlaneseq
        %v645 = vshrl.u32 %v644, 7
        %v646 = vsub.s32 0, %v645
        %v647 = vrot.slane %v621, %v646
        %vm648 = vcmp.eq.s32.totalorder %v640, %v647
        %vm649 = vcmp.eq.s32.totalorder %v641, %v647
        %v650 = vsel %vm648, 1, 0
        %v651 = vsel %vm649, 1, 0
        %v652 = vcvt.s32.f32 %v650
        %v653 = vcvt.s32.f32 %v651
        %v654 = vlaneseq
        %v655 = vshrl.u32 %v654, 7
        %v656 = vsub.s32 0, %v655
        %v657 = vrot.slane %v622, %v656
        %vm658 = vcmp.eq.s32.totalorder %v640, %v657
        %vm659 = vcmp.eq.s32.totalorder %v641, %v657
        %v660 = vsel %vm658, 1, 0
        %v661 = vsel %vm659, 1, 0
        %v662 = vcvt.s32.f32 %v660
        %v663 = vcvt.s32.f32 %v661
        %664 = vset.pattern.permute.xlu0 0
        %665 = vperm.xlu0 %664, %v623
        %v666 = vpop.permute.xlu0 %665
        %667 = vset.pattern.permute.xlu0 0
        %668 = vperm.xlu0 %667, %v624
        %v669 = vpop.permute.xlu0 %668
        %670 = vset.pattern.permute.xlu0 0
        %671 = vperm.xlu0 %670, %v625
        %v672 = vpop.permute.xlu0 %671
        %673 = vset.pattern.permute.xlu0 0
        %674 = vperm.xlu0 %673, %v626
        %v675 = vpop.permute.xlu0 %674
        %676 = vset.pattern.permute.xlu0 0
        %677 = vperm.xlu0 %676, %v627
        %v678 = vpop.permute.xlu0 %677
        %679 = vset.pattern.permute.xlu0 0
        %680 = vperm.xlu0 %679, %v628
        %v681 = vpop.permute.xlu0 %680
        %682 = vset.pattern.permute.xlu0 0
        %683 = vperm.xlu0 %682, %v629
        %v684 = vpop.permute.xlu0 %683
        %685 = vset.pattern.permute.xlu0 0
        %686 = vperm.xlu0 %685, %v630
        %v687 = vpop.permute.xlu0 %686
        %688 = vset.pattern.permute.xlu0 0
        %689 = vperm.xlu0 %688, %v631
        %v690 = vpop.permute.xlu0 %689
        %691 = vset.pattern.permute.xlu0 0
        %692 = vperm.xlu0 %691, %v632
        %v693 = vpop.permute.xlu0 %692
        %694 = vset.pattern.permute.xlu0 0
        %695 = vperm.xlu0 %694, %v633
        %v696 = vpop.permute.xlu0 %695
        %697 = vset.pattern.permute.xlu0 0
        %698 = vperm.xlu0 %697, %v634
        %v699 = vpop.permute.xlu0 %698
        %700 = vset.pattern.permute.xlu0 0
        %701 = vperm.xlu0 %700, %v635
        %v702 = vpop.permute.xlu0 %701
        %703 = vset.pattern.permute.xlu0 0
        %704 = vperm.xlu0 %703, %v636
        %v705 = vpop.permute.xlu0 %704
        %706 = vset.pattern.permute.xlu0 0
        %707 = vperm.xlu0 %706, %v637
        %v708 = vpop.permute.xlu0 %707
        %709 = vset.pattern.permute.xlu0 0
        %710 = vperm.xlu0 %709, %v638
        %v711 = vpop.permute.xlu0 %710
        %vm712 = vcmp.eq.s32.totalorder %v643, %v666
        %vm713 = vcmp.eq.s32.totalorder %v643, %v669
        %vm714 = vcmp.eq.s32.totalorder %v643, %v672
        %vm715 = vcmp.eq.s32.totalorder %v643, %v675
        %vm716 = vcmp.eq.s32.totalorder %v643, %v678
        %vm717 = vcmp.eq.s32.totalorder %v643, %v681
        %vm718 = vcmp.eq.s32.totalorder %v643, %v684
        %vm719 = vcmp.eq.s32.totalorder %v643, %v687
        %vm720 = vcmp.eq.s32.totalorder %v643, %v690
        %vm721 = vcmp.eq.s32.totalorder %v643, %v693
        %vm722 = vcmp.eq.s32.totalorder %v643, %v696
        %vm723 = vcmp.eq.s32.totalorder %v643, %v699
        %vm724 = vcmp.eq.s32.totalorder %v643, %v702
        %vm725 = vcmp.eq.s32.totalorder %v643, %v705
        %vm726 = vcmp.eq.s32.totalorder %v643, %v708
        %vm727 = vcmp.eq.s32.totalorder %v643, %v711
        %v728 = vsel %vm712, 1, 0
        %v729 = vsel %vm713, 1, 0
        %v730 = vsel %vm714, 1, 0
        %v731 = vsel %vm715, 1, 0
        %v732 = vsel %vm716, 1, 0
        %v733 = vsel %vm717, 1, 0
        %v734 = vsel %vm718, 1, 0
        %v735 = vsel %vm719, 1, 0
        %v736 = vsel %vm720, 1, 0
        %v737 = vsel %vm721, 1, 0
        %v738 = vsel %vm722, 1, 0
        %v739 = vsel %vm723, 1, 0
        %v740 = vsel %vm724, 1, 0
        %v741 = vsel %vm725, 1, 0
        %v742 = vsel %vm726, 1, 0
        %v743 = vsel %vm727, 1, 0
        %v744 = vcvt.s32.f32 %v728
        %v745 = vcvt.s32.f32 %v729
        %v746 = vcvt.s32.f32 %v730
        %v747 = vcvt.s32.f32 %v731
        %v748 = vcvt.s32.f32 %v732
        %v749 = vcvt.s32.f32 %v733
        %v750 = vcvt.s32.f32 %v734
        %v751 = vcvt.s32.f32 %v735
        %v752 = vcvt.s32.f32 %v736
        %v753 = vcvt.s32.f32 %v737
        %v754 = vcvt.s32.f32 %v738
        %v755 = vcvt.s32.f32 %v739
        %v756 = vcvt.s32.f32 %v740
        %v757 = vcvt.s32.f32 %v741
        %v758 = vcvt.s32.f32 %v742
        %v759 = vcvt.s32.f32 %v743
        %v760 = vpack.c.bf16 %v745, %v744
        %v761 = vpack.c.bf16 %v747, %v746
        %v762 = vpack.c.bf16 %v749, %v748
        %v763 = vpack.c.bf16 %v751, %v750
        %v764 = vpack.c.bf16 %v753, %v752
        %v765 = vpack.c.bf16 %v755, %v754
        %v766 = vpack.c.bf16 %v757, %v756
        %v767 = vpack.c.bf16 %v759, %v758
        %vm768 = vcmask 130048
        %v770 = vsel %vm768, %v620, 0
        %772 = vmatprep.subr.mxu0 0.0
        %773 = vmatpush1.msra.mxu0 %v662
        %774 = vmatprep.subr.mxu0 0.0
        %775 = vmatpush1.msra.mxu0 %v663
        %776 = vmatprep.subr.mxu0 0.0
        %777 = vmatpush1.msra.mxu0 0.0
        %778 = vmatprep.subr.mxu0 0.0
        %779 = vmatpush1.msra.mxu0 0.0
        %780 = vmatprep.subr.mxu0 0.0
        %781 = vmatpush1.msra.mxu0 0.0
        %782 = vmatprep.subr.mxu0 0.0
        %783 = vmatpush1.msra.mxu0 0.0
        %784 = vmatprep.subr.mxu0 0.0
        %785 = vmatpush1.msra.mxu0 0.0
        %786 = vmatprep.subr.mxu0 0.0
        %787 = vmatpush1.msra.mxu0 0.0
        %788 = vmatprep.subr.mxu0 0.0
        %789 = vmatpush1.msra.mxu0 0.0
        %790 = vmatprep.subr.mxu0 0.0
        %791 = vmatpush1.msra.mxu0 0.0
        %792 = vmatprep.subr.mxu0 0.0
        %793 = vmatpush1.msra.mxu0 0.0
        %794 = vmatprep.subr.mxu0 0.0
        %795 = vmatpush1.msra.mxu0 0.0
        %796 = vmatprep.subr.mxu0 0.0
        %797 = vmatpush1.msra.mxu0 0.0
        %798 = vmatprep.subr.mxu0 0.0
        %799 = vmatpush1.msra.mxu0 0.0
        %800 = vmatprep.subr.mxu0 0.0
        %801 = vmatpush1.msra.mxu0 0.0
        %802 = vmatprep.subr.mxu0 0.0
        %803 = vmatpush1.msra.mxu0 0.0
        %804 = vmatprep.subr.mxu0 0.0
        %805 = vmatpush1.msra.mxu0 0.0
        %806 = vmatprep.subr.mxu0 0.0
        %807 = vmatpush1.msra.mxu0 0.0
        %808 = vmatprep.subr.mxu0 0.0
        %809 = vmatpush1.msra.mxu0 0.0
        %810 = vmatprep.subr.mxu0 0.0
        %811 = vmatpush1.msra.mxu0 0.0
        %812 = vmatprep.subr.mxu0 0.0
        %813 = vmatpush1.msra.mxu0 0.0
        %814 = vmatprep.subr.mxu0 0.0
        %815 = vmatpush1.msra.mxu0 0.0
        %816 = vmatprep.subr.mxu0 0.0
        %817 = vmatpush1.msra.mxu0 0.0
        %818 = vmatprep.subr.mxu0 0.0
        %819 = vmatpush1.msra.mxu0 0.0
        %820 = vmatprep.subr.mxu0 0.0
        %821 = vmatpush1.msra.mxu0 0.0
        %822 = vmatprep.subr.mxu0 0.0
        %823 = vmatpush1.msra.mxu0 0.0
        %824 = vmatprep.subr.mxu0 0.0
        %825 = vmatpush1.msra.mxu0 0.0
        %826 = vmatprep.subr.mxu0 0.0
        %827 = vmatpush1.msra.mxu0 0.0
        %828 = vmatprep.subr.mxu0 0.0
        %829 = vmatpush1.msra.mxu0 0.0
        %830 = vmatprep.subr.mxu0 0.0
        %831 = vmatpush1.msra.mxu0 0.0
        %832 = vmatprep.subr.mxu0 0.0
        %833 = vmatpush1.msra.mxu0 0.0
        %834 = vmatprep.subr.mxu0 0.0
        %835 = vmatpush1.msra.mxu0 0.0
        %836 = vmatprep.mubr.f32.mxu0 0.0
        %837 = vmatmul.mubr.f32.gmra.mrb[0].mxu0 %v770
        %v838 = vpop.f32.mrb[0].mxu0
        %v839 = vadd.f32 0.0, %v838
        %v840 = vpop.f32.mrb[0].mxu0
        %841 = vdwg.mxu0
        %v843 = vsel %vm768, %v619, 0
        %845 = vmatprep.subr.mxu0 0.0
        %846 = vmatpush1.msra.mxu0 %v652
        %847 = vmatprep.subr.mxu0 0.0
        %848 = vmatpush1.msra.mxu0 %v653
        %849 = vmatprep.subr.mxu0 0.0
        %850 = vmatpush1.msra.mxu0 0.0
        %851 = vmatprep.subr.mxu0 0.0
        %852 = vmatpush1.msra.mxu0 0.0
        %853 = vmatprep.subr.mxu0 0.0
        %854 = vmatpush1.msra.mxu0 0.0
        %855 = vmatprep.subr.mxu0 0.0
        %856 = vmatpush1.msra.mxu0 0.0
        %857 = vmatprep.subr.mxu0 0.0
        %858 = vmatpush1.msra.mxu0 0.0
        %859 = vmatprep.subr.mxu0 0.0
        %860 = vmatpush1.msra.mxu0 0.0
        %861 = vmatprep.subr.mxu0 0.0
        %862 = vmatpush1.msra.mxu0 0.0
        %863 = vmatprep.subr.mxu0 0.0
        %864 = vmatpush1.msra.mxu0 0.0
        %865 = vmatprep.subr.mxu0 0.0
        %866 = vmatpush1.msra.mxu0 0.0
        %867 = vmatprep.subr.mxu0 0.0
        %868 = vmatpush1.msra.mxu0 0.0
        %869 = vmatprep.subr.mxu0 0.0
        %870 = vmatpush1.msra.mxu0 0.0
        %871 = vmatprep.subr.mxu0 0.0
        %872 = vmatpush1.msra.mxu0 0.0
        %873 = vmatprep.subr.mxu0 0.0
        %874 = vmatpush1.msra.mxu0 0.0
        %875 = vmatprep.subr.mxu0 0.0
        %876 = vmatpush1.msra.mxu0 0.0
        %877 = vmatprep.subr.mxu0 0.0
        %878 = vmatpush1.msra.mxu0 0.0
        %879 = vmatprep.subr.mxu0 0.0
        %880 = vmatpush1.msra.mxu0 0.0
        %881 = vmatprep.subr.mxu0 0.0
        %882 = vmatpush1.msra.mxu0 0.0
        %883 = vmatprep.subr.mxu0 0.0
        %884 = vmatpush1.msra.mxu0 0.0
        %885 = vmatprep.subr.mxu0 0.0
        %886 = vmatpush1.msra.mxu0 0.0
        %887 = vmatprep.subr.mxu0 0.0
        %888 = vmatpush1.msra.mxu0 0.0
        %889 = vmatprep.subr.mxu0 0.0
        %890 = vmatpush1.msra.mxu0 0.0
        %891 = vmatprep.subr.mxu0 0.0
        %892 = vmatpush1.msra.mxu0 0.0
        %893 = vmatprep.subr.mxu0 0.0
        %894 = vmatpush1.msra.mxu0 0.0
        %895 = vmatprep.subr.mxu0 0.0
        %896 = vmatpush1.msra.mxu0 0.0
        %897 = vmatprep.subr.mxu0 0.0
        %898 = vmatpush1.msra.mxu0 0.0
        %899 = vmatprep.subr.mxu0 0.0
        %900 = vmatpush1.msra.mxu0 0.0
        %901 = vmatprep.subr.mxu0 0.0
        %902 = vmatpush1.msra.mxu0 0.0
        %903 = vmatprep.subr.mxu0 0.0
        %904 = vmatpush1.msra.mxu0 0.0
        %905 = vmatprep.subr.mxu0 0.0
        %906 = vmatpush1.msra.mxu0 0.0
        %907 = vmatprep.subr.mxu0 0.0
        %908 = vmatpush1.msra.mxu0 0.0
        %909 = vmatprep.mubr.f32.mxu0 0.0
        %910 = vmatmul.mubr.f32.gmra.mrb[0].mxu0 %v843
        %v911 = vpop.f32.mrb[0].mxu0
        %v912 = vadd.f32 %v839, %v911
        %v913 = vpop.f32.mrb[0].mxu0
        %914 = vdwg.mxu0
        %v915 = vld [vmem:[%s7] sm:$0xf]
        %917 = vset.pattern.permute.xlu0 0
        %918 = vperm.xlu0 %917, %v915
        %v919 = vpop.permute.xlu0 %918
        %v921 = vadd.f32 %v912, %v919
        %vm922 = vcmp.ge.f32.partialorder %v921, 0.0
        %v923 = vmul.f32 %v921, 0.2
        %v924 = vsel %vm922, %v921, %v923
        %v925 = vlaneseq
        %v926 = vshrl.u32 %v925, 7
        %v927 = vsub.s32 0, %v926
        %v928 = vrot.slane %v924, %v927
        %v929 = vsel %vm648, %v928, -1e+30
        %v930 = vsel %vm649, %v928, -1e+30
        %931 = vmax.xlane.f32.xlu0 %v929
        %v932 = vpop.xlane.xlu0 %931
        %933 = vmax.xlane.f32.xlu0 %v930
        %v934 = vpop.xlane.xlu0 %933
        %v935 = vlaneseq
        %v936 = vshrl.u32 %v935, 7
        %v937 = vsub.s32 1, %v936
        %v938 = vrot.slane %v924, %v937
        %v939 = vsel %vm648, %v938, -1e+30
        %v940 = vsel %vm649, %v938, -1e+30
        %941 = vmax.xlane.f32.xlu0 %v939
        %v942 = vpop.xlane.xlu0 %941
        %943 = vmax.xlane.f32.xlu0 %v940
        %v944 = vpop.xlane.xlu0 %943
        %v945 = vlaneseq
        %v946 = vshrl.u32 %v945, 7
        %v947 = vsub.s32 2, %v946
        %v948 = vrot.slane %v924, %v947
        %v949 = vsel %vm648, %v948, -1e+30
        %v950 = vsel %vm649, %v948, -1e+30
        %951 = vmax.xlane.f32.xlu0 %v949
        %v952 = vpop.xlane.xlu0 %951
        %953 = vmax.xlane.f32.xlu0 %v950
        %v954 = vpop.xlane.xlu0 %953
        %v955 = vlaneseq
        %v956 = vshrl.u32 %v955, 7
        %v957 = vsub.s32 3, %v956
        %v958 = vrot.slane %v924, %v957
        %v959 = vsel %vm648, %v958, -1e+30
        %v960 = vsel %vm649, %v958, -1e+30
        %961 = vmax.xlane.f32.xlu0 %v959
        %v962 = vpop.xlane.xlu0 %961
        %963 = vmax.xlane.f32.xlu0 %v960
        %v964 = vpop.xlane.xlu0 %963
        %vm965 = vcmask 7168
        %v966 = vsel %vm965, %v932, %v942
        %v967 = vsel %vm965, %v934, %v944
        %vm968 = vcmask 15360
        %v969 = vsel %vm968, %v966, %v952
        %v970 = vsel %vm968, %v967, %v954
        %vm971 = vcmask 23552
        %v972 = vsel %vm971, %v969, %v962
        %v973 = vsel %vm971, %v970, %v964
        %v974 = vld [vmem:[#allocation5] sm:$0xff]
        %v975 = vld [vmem:[#allocation5 + $0x8] sm:$0xff]
        %v976 = vmax.f32 %v974, %v972
        %v977 = vmax.f32 %v975, %v973
        %v978 = vsub.f32 %v974, %v976
        %v979 = vsub.f32 %v975, %v977
        %v980 = vmul.f32 %v978, 1.442695
        %v981 = vpow.pop %v980
        %v982 = vmul.f32 %v979, 1.442695
        %v983 = vpow.pop %v982
        %vm984 = vcmask 31744
        %985 = vst.msk [vmem:[#allocation5] sm:$0xff] %vm984, %v976
        %986 = vst.msk [vmem:[#allocation5 + $0x8] sm:$0xff] %vm984, %v977
        %987 = vxpose.xlu0.b32.start [1/16] %v976, 128
        %988 = vxpose.xlu0.b32.cont [2/16] %v977, 128
        %989 = vxpose.xlu0.b32.cont [3/16] 0.0, 128
        %990 = vxpose.xlu0.b32.cont [4/16] 0.0, 128
        %991 = vxpose.xlu0.b32.cont [5/16] 0.0, 128
        %992 = vxpose.xlu0.b32.cont [6/16] 0.0, 128
        %993 = vxpose.xlu0.b32.cont [7/16] 0.0, 128
        %994 = vxpose.xlu0.b32.cont [8/16] 0.0, 128
        %995 = vxpose.xlu0.b32.cont [9/16] 0.0, 128
        %996 = vxpose.xlu0.b32.cont [10/16] 0.0, 128
        %997 = vxpose.xlu0.b32.cont [11/16] 0.0, 128
        %998 = vxpose.xlu0.b32.cont [12/16] 0.0, 128
        %999 = vxpose.xlu0.b32.cont [13/16] 0.0, 128
        %1000 = vxpose.xlu0.b32.cont [14/16] 0.0, 128
        %1001 = vxpose.xlu0.b32.cont [15/16] 0.0, 128
        %1002 = vxpose.xlu0.b32.end [16/16] 0.0, 128
        %v1003 = vpop.trf.xlu0
        %v1004 = vpop.trf.xlu0
        %v1005 = vpop.trf.xlu0
        %v1006 = vpop.trf.xlu0
        %v1007 = vpop.trf.xlu0
        %v1008 = vpop.trf.xlu0
        %v1009 = vpop.trf.xlu0
        %v1010 = vpop.trf.xlu0
        %v1011 = vpop.trf.xlu0
        %v1012 = vpop.trf.xlu0
        %v1013 = vpop.trf.xlu0
        %v1014 = vpop.trf.xlu0
        %v1015 = vpop.trf.xlu0
        %v1016 = vpop.trf.xlu0
        %v1017 = vpop.trf.xlu0
        %v1018 = vpop.trf.xlu0
        %v1020 = vsel %vm768, %v1003, 0
        %1022 = vmatprep.subr.mxu0 0.0
        %1023 = vmatpush1.msra.mxu0 %v652
        %1024 = vmatprep.subr.mxu0 0.0
        %1025 = vmatpush1.msra.mxu0 %v653
        %1026 = vmatprep.subr.mxu0 0.0
        %1027 = vmatpush1.msra.mxu0 0.0
        %1028 = vmatprep.subr.mxu0 0.0
        %1029 = vmatpush1.msra.mxu0 0.0
        %1030 = vmatprep.subr.mxu0 0.0
        %1031 = vmatpush1.msra.mxu0 0.0
        %1032 = vmatprep.subr.mxu0 0.0
        %1033 = vmatpush1.msra.mxu0 0.0
        %1034 = vmatprep.subr.mxu0 0.0
        %1035 = vmatpush1.msra.mxu0 0.0
        %1036 = vmatprep.subr.mxu0 0.0
        %1037 = vmatpush1.msra.mxu0 0.0
        %1038 = vmatprep.subr.mxu0 0.0
        %1039 = vmatpush1.msra.mxu0 0.0
        %1040 = vmatprep.subr.mxu0 0.0
        %1041 = vmatpush1.msra.mxu0 0.0
        %1042 = vmatprep.subr.mxu0 0.0
        %1043 = vmatpush1.msra.mxu0 0.0
        %1044 = vmatprep.subr.mxu0 0.0
        %1045 = vmatpush1.msra.mxu0 0.0
        %1046 = vmatprep.subr.mxu0 0.0
        %1047 = vmatpush1.msra.mxu0 0.0
        %1048 = vmatprep.subr.mxu0 0.0
        %1049 = vmatpush1.msra.mxu0 0.0
        %1050 = vmatprep.subr.mxu0 0.0
        %1051 = vmatpush1.msra.mxu0 0.0
        %1052 = vmatprep.subr.mxu0 0.0
        %1053 = vmatpush1.msra.mxu0 0.0
        %1054 = vmatprep.subr.mxu0 0.0
        %1055 = vmatpush1.msra.mxu0 0.0
        %1056 = vmatprep.subr.mxu0 0.0
        %1057 = vmatpush1.msra.mxu0 0.0
        %1058 = vmatprep.subr.mxu0 0.0
        %1059 = vmatpush1.msra.mxu0 0.0
        %1060 = vmatprep.subr.mxu0 0.0
        %1061 = vmatpush1.msra.mxu0 0.0
        %1062 = vmatprep.subr.mxu0 0.0
        %1063 = vmatpush1.msra.mxu0 0.0
        %1064 = vmatprep.subr.mxu0 0.0
        %1065 = vmatpush1.msra.mxu0 0.0
        %1066 = vmatprep.subr.mxu0 0.0
        %1067 = vmatpush1.msra.mxu0 0.0
        %1068 = vmatprep.subr.mxu0 0.0
        %1069 = vmatpush1.msra.mxu0 0.0
        %1070 = vmatprep.subr.mxu0 0.0
        %1071 = vmatpush1.msra.mxu0 0.0
        %1072 = vmatprep.subr.mxu0 0.0
        %1073 = vmatpush1.msra.mxu0 0.0
        %1074 = vmatprep.subr.mxu0 0.0
        %1075 = vmatpush1.msra.mxu0 0.0
        %1076 = vmatprep.subr.mxu0 0.0
        %1077 = vmatpush1.msra.mxu0 0.0
        %1078 = vmatprep.subr.mxu0 0.0
        %1079 = vmatpush1.msra.mxu0 0.0
        %1080 = vmatprep.subr.mxu0 0.0
        %1081 = vmatpush1.msra.mxu0 0.0
        %1082 = vmatprep.subr.mxu0 0.0
        %1083 = vmatpush1.msra.mxu0 0.0
        %1084 = vmatprep.subr.mxu0 0.0
        %1085 = vmatpush1.msra.mxu0 0.0
        %1086 = vmatprep.mubr.f32.mxu0 0.0
        %1087 = vmatmul.mubr.f32.gmra.mrb[0].mxu0 %v1020
        %v1088 = vpop.f32.mrb[0].mxu0
        %v1089 = vadd.f32 0.0, %v1088
        %v1090 = vpop.f32.mrb[0].mxu0
        %1091 = vdwg.mxu0
        %v1092 = vsub.f32 %v924, %v1089
        %v1093 = vmul.f32 %v1092, 1.442695
        %v1094 = vpow.pop %v1093
        %1095 = vxpose.xlu0.b32.start [1/16] %v1094, 128
        %1096 = vxpose.xlu0.b32.cont [2/16] 0.0, 128
        %1097 = vxpose.xlu0.b32.cont [3/16] 0.0, 128
        %1098 = vxpose.xlu0.b32.cont [4/16] 0.0, 128
        %1099 = vxpose.xlu0.b32.cont [5/16] 0.0, 128
        %1100 = vxpose.xlu0.b32.cont [6/16] 0.0, 128
        %1101 = vxpose.xlu0.b32.cont [7/16] 0.0, 128
        %1102 = vxpose.xlu0.b32.cont [8/16] 0.0, 128
        %1103 = vxpose.xlu0.b32.cont [9/16] 0.0, 128
        %1104 = vxpose.xlu0.b32.cont [10/16] 0.0, 128
        %1105 = vxpose.xlu0.b32.cont [11/16] 0.0, 128
        %1106 = vxpose.xlu0.b32.cont [12/16] 0.0, 128
        %1107 = vxpose.xlu0.b32.cont [13/16] 0.0, 128
        %1108 = vxpose.xlu0.b32.cont [14/16] 0.0, 128
        %1109 = vxpose.xlu0.b32.cont [15/16] 0.0, 128
        %1110 = vxpose.xlu0.b32.end [16/16] 0.0, 128
        %v1111 = vpop.trf.xlu0
        %v1112 = vpop.trf.xlu0
        %v1113 = vpop.trf.xlu0
        %v1114 = vpop.trf.xlu0
        %v1115 = vpop.trf.xlu0
        %v1116 = vpop.trf.xlu0
        %v1117 = vpop.trf.xlu0
        %v1118 = vpop.trf.xlu0
        %v1119 = vpop.trf.xlu0
        %v1120 = vpop.trf.xlu0
        %v1121 = vpop.trf.xlu0
        %v1122 = vpop.trf.xlu0
        %v1123 = vpop.trf.xlu0
        %v1124 = vpop.trf.xlu0
        %v1125 = vpop.trf.xlu0
        %v1126 = vpop.trf.xlu0
        %v1127 = vld [vmem:[#allocation6] sm:$0xff]
        %v1128 = vld [vmem:[#allocation6 + $0x8] sm:$0xff]
        %v1129 = vmul.f32 %v981, %v1127
        %v1130 = vmul.f32 %v983, %v1128
        %1131 = vmatprep.subr.mxu0 0.0
        %1132 = vmatpush1.msra.mxu0 %v1111
        %1133 = vmatprep.subr.mxu0 0.0
        %1134 = vmatpush1.msra.mxu0 %v1112
        %1135 = vmatprep.subr.mxu0 0.0
        %1136 = vmatpush1.msra.mxu0 %v1113
        %1137 = vmatprep.subr.mxu0 0.0
        %1138 = vmatpush1.msra.mxu0 %v1114
        %1139 = vmatprep.subr.mxu0 0.0
        %1140 = vmatpush1.msra.mxu0 %v1115
        %1141 = vmatprep.subr.mxu0 0.0
        %1142 = vmatpush1.msra.mxu0 %v1116
        %1143 = vmatprep.subr.mxu0 0.0
        %1144 = vmatpush1.msra.mxu0 %v1117
        %1145 = vmatprep.subr.mxu0 0.0
        %1146 = vmatpush1.msra.mxu0 %v1118
        %1147 = vmatprep.subr.mxu0 0.0
        %1148 = vmatpush1.msra.mxu0 %v1119
        %1149 = vmatprep.subr.mxu0 0.0
        %1150 = vmatpush1.msra.mxu0 %v1120
        %1151 = vmatprep.subr.mxu0 0.0
        %1152 = vmatpush1.msra.mxu0 %v1121
        %1153 = vmatprep.subr.mxu0 0.0
        %1154 = vmatpush1.msra.mxu0 %v1122
        %1155 = vmatprep.subr.mxu0 0.0
        %1156 = vmatpush1.msra.mxu0 %v1123
        %1157 = vmatprep.subr.mxu0 0.0
        %1158 = vmatpush1.msra.mxu0 %v1124
        %1159 = vmatprep.subr.mxu0 0.0
        %1160 = vmatpush1.msra.mxu0 %v1125
        %1161 = vmatprep.subr.mxu0 0.0
        %1162 = vmatpush1.msra.mxu0 %v1126
        %1163 = vmatprep.subr.mxu0 0.0
        %1164 = vmatpush1.msra.mxu0 0.0
        %1165 = vmatprep.subr.mxu0 0.0
        %1166 = vmatpush1.msra.mxu0 0.0
        %1167 = vmatprep.subr.mxu0 0.0
        %1168 = vmatpush1.msra.mxu0 0.0
        %1169 = vmatprep.subr.mxu0 0.0
        %1170 = vmatpush1.msra.mxu0 0.0
        %1171 = vmatprep.subr.mxu0 0.0
        %1172 = vmatpush1.msra.mxu0 0.0
        %1173 = vmatprep.subr.mxu0 0.0
        %1174 = vmatpush1.msra.mxu0 0.0
        %1175 = vmatprep.subr.mxu0 0.0
        %1176 = vmatpush1.msra.mxu0 0.0
        %1177 = vmatprep.subr.mxu0 0.0
        %1178 = vmatpush1.msra.mxu0 0.0
        %1179 = vmatprep.subr.mxu0 0.0
        %1180 = vmatpush1.msra.mxu0 0.0
        %1181 = vmatprep.subr.mxu0 0.0
        %1182 = vmatpush1.msra.mxu0 0.0
        %1183 = vmatprep.subr.mxu0 0.0
        %1184 = vmatpush1.msra.mxu0 0.0
        %1185 = vmatprep.subr.mxu0 0.0
        %1186 = vmatpush1.msra.mxu0 0.0
        %1187 = vmatprep.subr.mxu0 0.0
        %1188 = vmatpush1.msra.mxu0 0.0
        %1189 = vmatprep.subr.mxu0 0.0
        %1190 = vmatpush1.msra.mxu0 0.0
        %1191 = vmatprep.subr.mxu0 0.0
        %1192 = vmatpush1.msra.mxu0 0.0
        %1193 = vmatprep.subr.mxu0 0.0
        %1194 = vmatpush1.msra.mxu0 0.0
        %1195 = vmatprep.mubr.f32.mxu0 0.0
        %1196 = vmatmul.mubr.f32.gmra.mrb[0].mxu0 %v652
        %v1197 = vpop.f32.mrb[0].mxu0
        %v1198 = vadd.f32 0.0, %v1197
        %v1199 = vpop.f32.mrb[0].mxu0
        %1200 = vmatprep.mubr.f32.mxu0 0.0
        %1201 = vmatmul.mubr.f32.gmra.mrb[0].mxu0 %v653
        %v1202 = vpop.f32.mrb[0].mxu0
        %v1203 = vadd.f32 0.0, %v1202
        %v1204 = vpop.f32.mrb[0].mxu0
        %1205 = vdwg.mxu0
        %v1206 = vadd.f32 %v1129, %v1198
        %v1207 = vadd.f32 %v1130, %v1203
        %1208 = vst.msk [vmem:[#allocation6] sm:$0xff] %vm984, %v1206
        %1209 = vst.msk [vmem:[#allocation6 + $0x8] sm:$0xff] %vm984, %v1207
        %v1210 = vpack.c.bf16 %v618, %v617
        %v1212 = vsel %vm768, %v760, 0
        %v1215 = vsel %vm768, %v761, 0
        %v1218 = vsel %vm768, %v762, 0
        %v1221 = vsel %vm768, %v763, 0
        %v1224 = vsel %vm768, %v764, 0
        %v1227 = vsel %vm768, %v765, 0
        %v1230 = vsel %vm768, %v766, 0
        %v1233 = vsel %vm768, %v767, 0
        %1235 = vmatprep.subr.bf16.mxu0 0
        %1236 = vmatpush1.bf16.msra.mxu0 %v1210
        %1237 = vmatprep.subr.bf16.mxu0 0
        %1238 = vmatpush1.bf16.msra.mxu0 0
        %1239 = vmatprep.subr.bf16.mxu0 0
        %1240 = vmatpush1.bf16.msra.mxu0 0
        %1241 = vmatprep.subr.bf16.mxu0 0
        %1242 = vmatpush1.bf16.msra.mxu0 0
        %1243 = vmatprep.subr.bf16.mxu0 0
        %1244 = vmatpush1.bf16.msra.mxu0 0
        %1245 = vmatprep.subr.bf16.mxu0 0
        %1246 = vmatpush1.bf16.msra.mxu0 0
        %1247 = vmatprep.subr.bf16.mxu0 0
        %1248 = vmatpush1.bf16.msra.mxu0 0
        %1249 = vmatprep.subr.bf16.mxu0 0
        %1250 = vmatpush1.bf16.msra.mxu0 0
        %1251 = vmatprep.subr.bf16.mxu0 0
        %1252 = vmatpush1.bf16.msra.mxu0 0
        %1253 = vmatprep.subr.bf16.mxu0 0
        %1254 = vmatpush1.bf16.msra.mxu0 0
        %1255 = vmatprep.subr.bf16.mxu0 0
        %1256 = vmatpush1.bf16.msra.mxu0 0
        %1257 = vmatprep.subr.bf16.mxu0 0
        %1258 = vmatpush1.bf16.msra.mxu0 0
        %1259 = vmatprep.subr.bf16.mxu0 0
        %1260 = vmatpush1.bf16.msra.mxu0 0
        %1261 = vmatprep.subr.bf16.mxu0 0
        %1262 = vmatpush1.bf16.msra.mxu0 0
        %1263 = vmatprep.subr.bf16.mxu0 0
        %1264 = vmatpush1.bf16.msra.mxu0 0
        %1265 = vmatprep.subr.bf16.mxu0 0
        %1266 = vmatpush1.bf16.msra.mxu0 0
        %1267 = vmatprep.mubr.bf16.mxu0 0
        %1268 = vmatmul.mubr.bf16.gmra.mrb[0].mxu0 %v1212
        %v1269 = vpop.f32.mrb[0].mxu0
        %v1270 = vadd.f32 0.0, %v1269
        %v1271 = vpop.f32.mrb[0].mxu0
        %v1272 = vpop.f32.mrb[0].mxu0
        %v1273 = vadd.f32 0.0, %v1272
        %v1274 = vpop.f32.mrb[0].mxu0
        %1275 = vmatprep.mubr.bf16.mxu0 0
        %1276 = vmatmul.mubr.bf16.gmra.mrb[0].mxu0 %v1215
        %v1277 = vpop.f32.mrb[0].mxu0
        %v1278 = vadd.f32 0.0, %v1277
        %v1279 = vpop.f32.mrb[0].mxu0
        %v1280 = vpop.f32.mrb[0].mxu0
        %v1281 = vadd.f32 0.0, %v1280
        %v1282 = vpop.f32.mrb[0].mxu0
        %1283 = vmatprep.mubr.bf16.mxu0 0
        %1284 = vmatmul.mubr.bf16.gmra.mrb[0].mxu0 %v1218
        %v1285 = vpop.f32.mrb[0].mxu0
        %v1286 = vadd.f32 0.0, %v1285
        %v1287 = vpop.f32.mrb[0].mxu0
        %v1288 = vpop.f32.mrb[0].mxu0
        %v1289 = vadd.f32 0.0, %v1288
        %v1290 = vpop.f32.mrb[0].mxu0
        %1291 = vmatprep.mubr.bf16.mxu0 0
        %1292 = vmatmul.mubr.bf16.gmra.mrb[0].mxu0 %v1221
        %v1293 = vpop.f32.mrb[0].mxu0
        %v1294 = vadd.f32 0.0, %v1293
        %v1295 = vpop.f32.mrb[0].mxu0
        %v1296 = vpop.f32.mrb[0].mxu0
        %v1297 = vadd.f32 0.0, %v1296
        %v1298 = vpop.f32.mrb[0].mxu0
        %1299 = vmatprep.mubr.bf16.mxu0 0
        %1300 = vmatmul.mubr.bf16.gmra.mrb[0].mxu0 %v1224
        %v1301 = vpop.f32.mrb[0].mxu0
        %v1302 = vadd.f32 0.0, %v1301
        %v1303 = vpop.f32.mrb[0].mxu0
        %v1304 = vpop.f32.mrb[0].mxu0
        %v1305 = vadd.f32 0.0, %v1304
        %v1306 = vpop.f32.mrb[0].mxu0
        %1307 = vmatprep.mubr.bf16.mxu0 0
        %1308 = vmatmul.mubr.bf16.gmra.mrb[0].mxu0 %v1227
        %v1309 = vpop.f32.mrb[0].mxu0
        %v1310 = vadd.f32 0.0, %v1309
        %v1311 = vpop.f32.mrb[0].mxu0
        %v1312 = vpop.f32.mrb[0].mxu0
        %v1313 = vadd.f32 0.0, %v1312
        %v1314 = vpop.f32.mrb[0].mxu0
        %1315 = vmatprep.mubr.bf16.mxu0 0
        %1316 = vmatmul.mubr.bf16.gmra.mrb[0].mxu0 %v1230
        %v1317 = vpop.f32.mrb[0].mxu0
        %v1318 = vadd.f32 0.0, %v1317
        %v1319 = vpop.f32.mrb[0].mxu0
        %v1320 = vpop.f32.mrb[0].mxu0
        %v1321 = vadd.f32 0.0, %v1320
        %v1322 = vpop.f32.mrb[0].mxu0
        %1323 = vmatprep.mubr.bf16.mxu0 0
        %1324 = vmatmul.mubr.bf16.gmra.mrb[0].mxu0 %v1233
        %v1325 = vpop.f32.mrb[0].mxu0
        %v1326 = vadd.f32 0.0, %v1325
        %v1327 = vpop.f32.mrb[0].mxu0
        %v1328 = vpop.f32.mrb[0].mxu0
        %v1329 = vadd.f32 0.0, %v1328
        %v1330 = vpop.f32.mrb[0].mxu0
        %1331 = vdwg.mxu0
        %v1332 = vld [vmem:[%s8] sm:$0xf]
        %v1334 = vsel %vm984, %v1111, 0
        %v1337 = vsel %vm984, %v1112, 0
        %v1340 = vsel %vm984, %v1113, 0
        %v1343 = vsel %vm984, %v1114, 0
        %v1346 = vsel %vm984, %v1115, 0
        %v1349 = vsel %vm984, %v1116, 0
        %v1352 = vsel %vm984, %v1117, 0
        %v1355 = vsel %vm984, %v1118, 0
        %v1358 = vsel %vm984, %v1119, 0
        %v1361 = vsel %vm984, %v1120, 0
        %v1364 = vsel %vm984, %v1121, 0
        %v1367 = vsel %vm984, %v1122, 0
        %v1370 = vsel %vm984, %v1123, 0
        %v1373 = vsel %vm984, %v1124, 0
        %v1376 = vsel %vm984, %v1125, 0
        %v1379 = vsel %vm984, %v1126, 0
        %vm1381 = vcmask 1043456
        %v1383 = vsel %vm1381, %v1332, 0
        %1385 = vmatprep.subr.mxu0 0.0
        %1386 = vmatpush1.msra.mxu0 %v1383
        %1387 = vmatprep.subr.mxu0 0.0
        %1388 = vmatpush1.msra.mxu0 0.0
        %1389 = vmatprep.subr.mxu0 0.0
        %1390 = vmatpush1.msra.mxu0 0.0
        %1391 = vmatprep.subr.mxu0 0.0
        %1392 = vmatpush1.msra.mxu0 0.0
        %1393 = vmatprep.subr.mxu0 0.0
        %1394 = vmatpush1.msra.mxu0 0.0
        %1395 = vmatprep.subr.mxu0 0.0
        %1396 = vmatpush1.msra.mxu0 0.0
        %1397 = vmatprep.subr.mxu0 0.0
        %1398 = vmatpush1.msra.mxu0 0.0
        %1399 = vmatprep.subr.mxu0 0.0
        %1400 = vmatpush1.msra.mxu0 0.0
        %1401 = vmatprep.subr.mxu0 0.0
        %1402 = vmatpush1.msra.mxu0 0.0
        %1403 = vmatprep.subr.mxu0 0.0
        %1404 = vmatpush1.msra.mxu0 0.0
        %1405 = vmatprep.subr.mxu0 0.0
        %1406 = vmatpush1.msra.mxu0 0.0
        %1407 = vmatprep.subr.mxu0 0.0
        %1408 = vmatpush1.msra.mxu0 0.0
        %1409 = vmatprep.subr.mxu0 0.0
        %1410 = vmatpush1.msra.mxu0 0.0
        %1411 = vmatprep.subr.mxu0 0.0
        %1412 = vmatpush1.msra.mxu0 0.0
        %1413 = vmatprep.subr.mxu0 0.0
        %1414 = vmatpush1.msra.mxu0 0.0
        %1415 = vmatprep.subr.mxu0 0.0
        %1416 = vmatpush1.msra.mxu0 0.0
        %1417 = vmatprep.subr.mxu0 0.0
        %1418 = vmatpush1.msra.mxu0 0.0
        %1419 = vmatprep.subr.mxu0 0.0
        %1420 = vmatpush1.msra.mxu0 0.0
        %1421 = vmatprep.subr.mxu0 0.0
        %1422 = vmatpush1.msra.mxu0 0.0
        %1423 = vmatprep.subr.mxu0 0.0
        %1424 = vmatpush1.msra.mxu0 0.0
        %1425 = vmatprep.subr.mxu0 0.0
        %1426 = vmatpush1.msra.mxu0 0.0
        %1427 = vmatprep.subr.mxu0 0.0
        %1428 = vmatpush1.msra.mxu0 0.0
        %1429 = vmatprep.subr.mxu0 0.0
        %1430 = vmatpush1.msra.mxu0 0.0
        %1431 = vmatprep.subr.mxu0 0.0
        %1432 = vmatpush1.msra.mxu0 0.0
        %1433 = vmatprep.subr.mxu0 0.0
        %1434 = vmatpush1.msra.mxu0 0.0
        %1435 = vmatprep.subr.mxu0 0.0
        %1436 = vmatpush1.msra.mxu0 0.0
        %1437 = vmatprep.subr.mxu0 0.0
        %1438 = vmatpush1.msra.mxu0 0.0
        %1439 = vmatprep.subr.mxu0 0.0
        %1440 = vmatpush1.msra.mxu0 0.0
        %1441 = vmatprep.subr.mxu0 0.0
        %1442 = vmatpush1.msra.mxu0 0.0
        %1443 = vmatprep.subr.mxu0 0.0
        %1444 = vmatpush1.msra.mxu0 0.0
        %1445 = vmatprep.subr.mxu0 0.0
        %1446 = vmatpush1.msra.mxu0 0.0
        %1447 = vmatprep.subr.mxu0 0.0
        %1448 = vmatpush1.msra.mxu0 0.0
        %1449 = vmatprep.mubr.f32.mxu0 0.0
        %1450 = vmatmul.mubr.f32.gmra.mrb[0].mxu0 %v1334
        %v1451 = vpop.f32.mrb[0].mxu0
        %v1452 = vadd.f32 0.0, %v1451
        %v1453 = vpop.f32.mrb[0].mxu0
        %1454 = vmatprep.mubr.f32.mxu0 0.0
        %1455 = vmatmul.mubr.f32.gmra.mrb[0].mxu0 %v1337
        %v1456 = vpop.f32.mrb[0].mxu0
        %v1457 = vadd.f32 0.0, %v1456
        %v1458 = vpop.f32.mrb[0].mxu0
        %1459 = vmatprep.mubr.f32.mxu0 0.0
        %1460 = vmatmul.mubr.f32.gmra.mrb[0].mxu0 %v1340
        %v1461 = vpop.f32.mrb[0].mxu0
        %v1462 = vadd.f32 0.0, %v1461
        %v1463 = vpop.f32.mrb[0].mxu0
        %1464 = vmatprep.mubr.f32.mxu0 0.0
        %1465 = vmatmul.mubr.f32.gmra.mrb[0].mxu0 %v1343
        %v1466 = vpop.f32.mrb[0].mxu0
        %v1467 = vadd.f32 0.0, %v1466
        %v1468 = vpop.f32.mrb[0].mxu0
        %1469 = vmatprep.mubr.f32.mxu0 0.0
        %1470 = vmatmul.mubr.f32.gmra.mrb[0].mxu0 %v1346
        %v1471 = vpop.f32.mrb[0].mxu0
        %v1472 = vadd.f32 0.0, %v1471
        %v1473 = vpop.f32.mrb[0].mxu0
        %1474 = vmatprep.mubr.f32.mxu0 0.0
        %1475 = vmatmul.mubr.f32.gmra.mrb[0].mxu0 %v1349
        %v1476 = vpop.f32.mrb[0].mxu0
        %v1477 = vadd.f32 0.0, %v1476
        %v1478 = vpop.f32.mrb[0].mxu0
        %1479 = vmatprep.mubr.f32.mxu0 0.0
        %1480 = vmatmul.mubr.f32.gmra.mrb[0].mxu0 %v1352
        %v1481 = vpop.f32.mrb[0].mxu0
        %v1482 = vadd.f32 0.0, %v1481
        %v1483 = vpop.f32.mrb[0].mxu0
        %1484 = vmatprep.mubr.f32.mxu0 0.0
        %1485 = vmatmul.mubr.f32.gmra.mrb[0].mxu0 %v1355
        %v1486 = vpop.f32.mrb[0].mxu0
        %v1487 = vadd.f32 0.0, %v1486
        %v1488 = vpop.f32.mrb[0].mxu0
        %1489 = vmatprep.mubr.f32.mxu0 0.0
        %1490 = vmatmul.mubr.f32.gmra.mrb[0].mxu0 %v1358
        %v1491 = vpop.f32.mrb[0].mxu0
        %v1492 = vadd.f32 0.0, %v1491
        %v1493 = vpop.f32.mrb[0].mxu0
        %1494 = vmatprep.mubr.f32.mxu0 0.0
        %1495 = vmatmul.mubr.f32.gmra.mrb[0].mxu0 %v1361
        %v1496 = vpop.f32.mrb[0].mxu0
        %v1497 = vadd.f32 0.0, %v1496
        %v1498 = vpop.f32.mrb[0].mxu0
        %1499 = vmatprep.mubr.f32.mxu0 0.0
        %1500 = vmatmul.mubr.f32.gmra.mrb[0].mxu0 %v1364
        %v1501 = vpop.f32.mrb[0].mxu0
        %v1502 = vadd.f32 0.0, %v1501
        %v1503 = vpop.f32.mrb[0].mxu0
        %1504 = vmatprep.mubr.f32.mxu0 0.0
        %1505 = vmatmul.mubr.f32.gmra.mrb[0].mxu0 %v1367
        %v1506 = vpop.f32.mrb[0].mxu0
        %v1507 = vadd.f32 0.0, %v1506
        %v1508 = vpop.f32.mrb[0].mxu0
        %1509 = vmatprep.mubr.f32.mxu0 0.0
        %1510 = vmatmul.mubr.f32.gmra.mrb[0].mxu0 %v1370
        %v1511 = vpop.f32.mrb[0].mxu0
        %v1512 = vadd.f32 0.0, %v1511
        %v1513 = vpop.f32.mrb[0].mxu0
        %1514 = vmatprep.mubr.f32.mxu0 0.0
        %1515 = vmatmul.mubr.f32.gmra.mrb[0].mxu0 %v1373
        %v1516 = vpop.f32.mrb[0].mxu0
        %v1517 = vadd.f32 0.0, %v1516
        %v1518 = vpop.f32.mrb[0].mxu0
        %1519 = vmatprep.mubr.f32.mxu0 0.0
        %1520 = vmatmul.mubr.f32.gmra.mrb[0].mxu0 %v1376
        %v1521 = vpop.f32.mrb[0].mxu0
        %v1522 = vadd.f32 0.0, %v1521
        %v1523 = vpop.f32.mrb[0].mxu0
        %1524 = vmatprep.mubr.f32.mxu0 0.0
        %1525 = vmatmul.mubr.f32.gmra.mrb[0].mxu0 %v1379
        %v1526 = vpop.f32.mrb[0].mxu0
        %v1527 = vadd.f32 0.0, %v1526
        %v1528 = vpop.f32.mrb[0].mxu0
        %1529 = vdwg.mxu0
        %v1530 = vmul.f32 %v1452, %v1270
        %v1531 = vmul.f32 %v1457, %v1273
        %v1532 = vmul.f32 %v1462, %v1278
        %v1533 = vmul.f32 %v1467, %v1281
        %v1534 = vmul.f32 %v1472, %v1286
        %v1535 = vmul.f32 %v1477, %v1289
        %v1536 = vmul.f32 %v1482, %v1294
        %v1537 = vmul.f32 %v1487, %v1297
        %v1538 = vmul.f32 %v1492, %v1302
        %v1539 = vmul.f32 %v1497, %v1305
        %v1540 = vmul.f32 %v1502, %v1310
        %v1541 = vmul.f32 %v1507, %v1313
        %v1542 = vmul.f32 %v1512, %v1318
        %v1543 = vmul.f32 %v1517, %v1321
        %v1544 = vmul.f32 %v1522, %v1326
        %v1545 = vmul.f32 %v1527, %v1329
        %v1547 = vsel %vm984, %v981, 0
        %v1550 = vsel %vm984, %v983, 0
        %1552 = vmatprep.subr.mxu0 0.0
        %1553 = vmatpush1.msra.mxu0 %v1383
        %1554 = vmatprep.subr.mxu0 0.0
        %1555 = vmatpush1.msra.mxu0 0.0
        %1556 = vmatprep.subr.mxu0 0.0
        %1557 = vmatpush1.msra.mxu0 0.0
        %1558 = vmatprep.subr.mxu0 0.0
        %1559 = vmatpush1.msra.mxu0 0.0
        %1560 = vmatprep.subr.mxu0 0.0
        %1561 = vmatpush1.msra.mxu0 0.0
        %1562 = vmatprep.subr.mxu0 0.0
        %1563 = vmatpush1.msra.mxu0 0.0
        %1564 = vmatprep.subr.mxu0 0.0
        %1565 = vmatpush1.msra.mxu0 0.0
        %1566 = vmatprep.subr.mxu0 0.0
        %1567 = vmatpush1.msra.mxu0 0.0
        %1568 = vmatprep.subr.mxu0 0.0
        %1569 = vmatpush1.msra.mxu0 0.0
        %1570 = vmatprep.subr.mxu0 0.0
        %1571 = vmatpush1.msra.mxu0 0.0
        %1572 = vmatprep.subr.mxu0 0.0
        %1573 = vmatpush1.msra.mxu0 0.0
        %1574 = vmatprep.subr.mxu0 0.0
        %1575 = vmatpush1.msra.mxu0 0.0
        %1576 = vmatprep.subr.mxu0 0.0
        %1577 = vmatpush1.msra.mxu0 0.0
        %1578 = vmatprep.subr.mxu0 0.0
        %1579 = vmatpush1.msra.mxu0 0.0
        %1580 = vmatprep.subr.mxu0 0.0
        %1581 = vmatpush1.msra.mxu0 0.0
        %1582 = vmatprep.subr.mxu0 0.0
        %1583 = vmatpush1.msra.mxu0 0.0
        %1584 = vmatprep.subr.mxu0 0.0
        %1585 = vmatpush1.msra.mxu0 0.0
        %1586 = vmatprep.subr.mxu0 0.0
        %1587 = vmatpush1.msra.mxu0 0.0
        %1588 = vmatprep.subr.mxu0 0.0
        %1589 = vmatpush1.msra.mxu0 0.0
        %1590 = vmatprep.subr.mxu0 0.0
        %1591 = vmatpush1.msra.mxu0 0.0
        %1592 = vmatprep.subr.mxu0 0.0
        %1593 = vmatpush1.msra.mxu0 0.0
        %1594 = vmatprep.subr.mxu0 0.0
        %1595 = vmatpush1.msra.mxu0 0.0
        %1596 = vmatprep.subr.mxu0 0.0
        %1597 = vmatpush1.msra.mxu0 0.0
        %1598 = vmatprep.subr.mxu0 0.0
        %1599 = vmatpush1.msra.mxu0 0.0
        %1600 = vmatprep.subr.mxu0 0.0
        %1601 = vmatpush1.msra.mxu0 0.0
        %1602 = vmatprep.subr.mxu0 0.0
        %1603 = vmatpush1.msra.mxu0 0.0
        %1604 = vmatprep.subr.mxu0 0.0
        %1605 = vmatpush1.msra.mxu0 0.0
        %1606 = vmatprep.subr.mxu0 0.0
        %1607 = vmatpush1.msra.mxu0 0.0
        %1608 = vmatprep.subr.mxu0 0.0
        %1609 = vmatpush1.msra.mxu0 0.0
        %1610 = vmatprep.subr.mxu0 0.0
        %1611 = vmatpush1.msra.mxu0 0.0
        %1612 = vmatprep.subr.mxu0 0.0
        %1613 = vmatpush1.msra.mxu0 0.0
        %1614 = vmatprep.subr.mxu0 0.0
        %1615 = vmatpush1.msra.mxu0 0.0
        %1616 = vmatprep.mubr.f32.mxu0 0.0
        %1617 = vmatmul.mubr.f32.gmra.mrb[0].mxu0 %v1547
        %v1618 = vpop.f32.mrb[0].mxu0
        %v1619 = vadd.f32 0.0, %v1618
        %v1620 = vpop.f32.mrb[0].mxu0
        %1621 = vmatprep.mubr.f32.mxu0 0.0
        %1622 = vmatmul.mubr.f32.gmra.mrb[0].mxu0 %v1550
        %v1623 = vpop.f32.mrb[0].mxu0
        %v1624 = vadd.f32 0.0, %v1623
        %v1625 = vpop.f32.mrb[0].mxu0
        %1626 = vdwg.mxu0
        %v1627 = vld [vmem:[#allocation7] sm:$0xff]
        %v1628 = vld [vmem:[#allocation7 + $0x8] sm:$0xff]
        %v1629 = vmul.f32 %v1619, %v1627
        %v1630 = vmul.f32 %v1624, %v1628
        %v1631 = vpack.c.bf16 %v653, %v652
        %v1632 = vpack.c.bf16 %v1531, %v1530
        %v1633 = vpack.c.bf16 %v1533, %v1532
        %v1634 = vpack.c.bf16 %v1535, %v1534
        %v1635 = vpack.c.bf16 %v1537, %v1536
        %v1636 = vpack.c.bf16 %v1539, %v1538
        %v1637 = vpack.c.bf16 %v1541, %v1540
        %v1638 = vpack.c.bf16 %v1543, %v1542
        %v1639 = vpack.c.bf16 %v1545, %v1544
        %1640 = vmatprep.subr.bf16.mxu0 0
        %1641 = vmatpush1.bf16.msra.mxu0 %v1632
        %1642 = vmatprep.subr.bf16.mxu0 0
        %1643 = vmatpush1.bf16.msra.mxu0 %v1633
        %1644 = vmatprep.subr.bf16.mxu0 0
        %1645 = vmatpush1.bf16.msra.mxu0 %v1634
        %1646 = vmatprep.subr.bf16.mxu0 0
        %1647 = vmatpush1.bf16.msra.mxu0 %v1635
        %1648 = vmatprep.subr.bf16.mxu0 0
        %1649 = vmatpush1.bf16.msra.mxu0 %v1636
        %1650 = vmatprep.subr.bf16.mxu0 0
        %1651 = vmatpush1.bf16.msra.mxu0 %v1637
        %1652 = vmatprep.subr.bf16.mxu0 0
        %1653 = vmatpush1.bf16.msra.mxu0 %v1638
        %1654 = vmatprep.subr.bf16.mxu0 0
        %1655 = vmatpush1.bf16.msra.mxu0 %v1639
        %1656 = vmatprep.subr.bf16.mxu0 0
        %1657 = vmatpush1.bf16.msra.mxu0 0
        %1658 = vmatprep.subr.bf16.mxu0 0
        %1659 = vmatpush1.bf16.msra.mxu0 0
        %1660 = vmatprep.subr.bf16.mxu0 0
        %1661 = vmatpush1.bf16.msra.mxu0 0
        %1662 = vmatprep.subr.bf16.mxu0 0
        %1663 = vmatpush1.bf16.msra.mxu0 0
        %1664 = vmatprep.subr.bf16.mxu0 0
        %1665 = vmatpush1.bf16.msra.mxu0 0
        %1666 = vmatprep.subr.bf16.mxu0 0
        %1667 = vmatpush1.bf16.msra.mxu0 0
        %1668 = vmatprep.subr.bf16.mxu0 0
        %1669 = vmatpush1.bf16.msra.mxu0 0
        %1670 = vmatprep.subr.bf16.mxu0 0
        %1671 = vmatpush1.bf16.msra.mxu0 0
        %1672 = vmatprep.mubr.bf16.mxu0 0
        %1673 = vmatmul.mubr.bf16.gmra.mrb[0].mxu0 %v1631
        %v1674 = vpop.f32.mrb[0].mxu0
        %v1675 = vadd.f32 0.0, %v1674
        %v1676 = vpop.f32.mrb[0].mxu0
        %v1677 = vpop.f32.mrb[0].mxu0
        %v1678 = vadd.f32 0.0, %v1677
        %v1679 = vpop.f32.mrb[0].mxu0
        %1680 = vdwg.mxu0
        %v1681 = vadd.f32 %v1629, %v1675
        %v1682 = vadd.f32 %v1630, %v1678
        %vm1683 = vcmask 261120
        %1684 = vst.msk [vmem:[#allocation7] sm:$0xff] %vm1683, %v1681
        %1685 = vst.msk [vmem:[#allocation7 + $0x8] sm:$0xff] %vm1683, %v1682
        %p1686 = scmp.eq.s32.totalorder %s21, 1
        // Predicated region
        $region61: #{tpu_custom_call.1} parent=55 // pred_check
          %p1687 = pneg %p1686
        $region62: #{tpu_custom_call.1} parent=55 // pred_check_branch
          %1689 = sbr.rel (%p1687) target = $region64
        $region63: #{tpu_custom_call.1} parent=55 // pred_region
          %v1690 = vld [vmem:[#allocation6] sm:$0xff]
          %v1691 = vld [vmem:[#allocation6 + $0x8] sm:$0xff]
          %v1692 = vld [vmem:[%s8] sm:$0xf]
          %v1694 = vsel %vm984, %v1690, 0
          %v1697 = vsel %vm984, %v1691, 0
          %v1700 = vsel %vm1381, %v1692, 0
          %1702 = vmatprep.subr.mxu0 0.0
          %1703 = vmatpush1.msra.mxu0 %v1700
          %1704 = vmatprep.subr.mxu0 0.0
          %1705 = vmatpush1.msra.mxu0 0.0
          %1706 = vmatprep.subr.mxu0 0.0
          %1707 = vmatpush1.msra.mxu0 0.0
          %1708 = vmatprep.subr.mxu0 0.0
          %1709 = vmatpush1.msra.mxu0 0.0
          %1710 = vmatprep.subr.mxu0 0.0
          %1711 = vmatpush1.msra.mxu0 0.0
          %1712 = vmatprep.subr.mxu0 0.0
          %1713 = vmatpush1.msra.mxu0 0.0
          %1714 = vmatprep.subr.mxu0 0.0
          %1715 = vmatpush1.msra.mxu0 0.0
          %1716 = vmatprep.subr.mxu0 0.0
          %1717 = vmatpush1.msra.mxu0 0.0
          %1718 = vmatprep.subr.mxu0 0.0
          %1719 = vmatpush1.msra.mxu0 0.0
          %1720 = vmatprep.subr.mxu0 0.0
          %1721 = vmatpush1.msra.mxu0 0.0
          %1722 = vmatprep.subr.mxu0 0.0
          %1723 = vmatpush1.msra.mxu0 0.0
          %1724 = vmatprep.subr.mxu0 0.0
          %1725 = vmatpush1.msra.mxu0 0.0
          %1726 = vmatprep.subr.mxu0 0.0
          %1727 = vmatpush1.msra.mxu0 0.0
          %1728 = vmatprep.subr.mxu0 0.0
          %1729 = vmatpush1.msra.mxu0 0.0
          %1730 = vmatprep.subr.mxu0 0.0
          %1731 = vmatpush1.msra.mxu0 0.0
          %1732 = vmatprep.subr.mxu0 0.0
          %1733 = vmatpush1.msra.mxu0 0.0
          %1734 = vmatprep.subr.mxu0 0.0
          %1735 = vmatpush1.msra.mxu0 0.0
          %1736 = vmatprep.subr.mxu0 0.0
          %1737 = vmatpush1.msra.mxu0 0.0
          %1738 = vmatprep.subr.mxu0 0.0
          %1739 = vmatpush1.msra.mxu0 0.0
          %1740 = vmatprep.subr.mxu0 0.0
          %1741 = vmatpush1.msra.mxu0 0.0
          %1742 = vmatprep.subr.mxu0 0.0
          %1743 = vmatpush1.msra.mxu0 0.0
          %1744 = vmatprep.subr.mxu0 0.0
          %1745 = vmatpush1.msra.mxu0 0.0
          %1746 = vmatprep.subr.mxu0 0.0
          %1747 = vmatpush1.msra.mxu0 0.0
          %1748 = vmatprep.subr.mxu0 0.0
          %1749 = vmatpush1.msra.mxu0 0.0
          %1750 = vmatprep.subr.mxu0 0.0
          %1751 = vmatpush1.msra.mxu0 0.0
          %1752 = vmatprep.subr.mxu0 0.0
          %1753 = vmatpush1.msra.mxu0 0.0
          %1754 = vmatprep.subr.mxu0 0.0
          %1755 = vmatpush1.msra.mxu0 0.0
          %1756 = vmatprep.subr.mxu0 0.0
          %1757 = vmatpush1.msra.mxu0 0.0
          %1758 = vmatprep.subr.mxu0 0.0
          %1759 = vmatpush1.msra.mxu0 0.0
          %1760 = vmatprep.subr.mxu0 0.0
          %1761 = vmatpush1.msra.mxu0 0.0
          %1762 = vmatprep.subr.mxu0 0.0
          %1763 = vmatpush1.msra.mxu0 0.0
          %1764 = vmatprep.subr.mxu0 0.0
          %1765 = vmatpush1.msra.mxu0 0.0
          %1766 = vmatprep.mubr.f32.mxu0 0.0
          %1767 = vmatmul.mubr.f32.gmra.mrb[0].mxu0 %v1694
          %v1768 = vpop.f32.mrb[0].mxu0
          %v1769 = vadd.f32 0.0, %v1768
          %v1770 = vpop.f32.mrb[0].mxu0
          %1771 = vmatprep.mubr.f32.mxu0 0.0
          %1772 = vmatmul.mubr.f32.gmra.mrb[0].mxu0 %v1697
          %v1773 = vpop.f32.mrb[0].mxu0
          %v1774 = vadd.f32 0.0, %v1773
          %v1775 = vpop.f32.mrb[0].mxu0
          %1776 = vdwg.mxu0
          %vm1777 = vcmp.gt.f32.partialorder %v1769, 0.0
          %vm1778 = vcmp.gt.f32.partialorder %v1774, 0.0
          %v1779 = vsel %vm1777, %v1769, 1.0
          %v1780 = vsel %vm1778, %v1774, 1.0
          %v1781 = vld [vmem:[#allocation7] sm:$0xff]
          %v1782 = vld [vmem:[#allocation7 + $0x8] sm:$0xff]
          %v1783 = vrcp.pop %v1779
          %v1784 = vrcp.pop %v1780
          %v1785 = vmul.f32 %v1781, %v1783
          %v1786 = vmul.f32 %v1782, %v1784
          %v1787 = vld [vmem:[#allocation2] sm:$0xff]
          %v1788 = vld [vmem:[#allocation2 + $0x8] sm:$0xff]
          %v1789 = vadd.f32 %v1785, %v1787
          %v1790 = vadd.f32 %v1786, %v1788
          %vm1791 = vcmp.gt.f32.partialorder %v1789, 0.0
          %vm1792 = vcmp.gt.f32.partialorder %v1790, 0.0
          %v1793 = vmin.f32 %v1789, 0.0
          %v1794 = vmin.f32 %v1790, 0.0
          %v1795 = vmul.f32 %v1793, 1.442695
          %v1796 = vpow.pop %v1795
          %v1797 = vmul.f32 %v1794, 1.442695
          %v1798 = vpow.pop %v1797
          %v1799 = vsub.f32 %v1796, 1.0
          %v1800 = vsub.f32 %v1798, 1.0
          %v1801 = vsel %vm1791, %v1789, %v1799
          %v1802 = vsel %vm1792, %v1790, %v1800
          %1803 = vst.msk [vmem:[#allocation8] sm:$0xff] %vm1683, %v1801
          %1804 = vst.msk [vmem:[#allocation8 + $0x8] sm:$0xff] %vm1683, %v1802
        $region64: #{tpu_custom_call.1} parent=55 // pred_fallthru
          _
        // Predicated region
        $region65: #{tpu_custom_call.1} parent=55 // pred_check
          %p1805 = pneg %p238
        $region66: #{tpu_custom_call.1} parent=55 // pred_check_branch
          %1807 = sbr.rel (%p1805) target = $region68
        $region67: #{tpu_custom_call.1} parent=55 // pred_region
          %s1809 = ssub.s32 256, 256
          %1810 = vsyncadd [#allocation9], %s1809
          %s1811 = sshll.u32 [#allocation8], 4
          %s1812 = int_to_ptr.vmem [resolvable:$true] %s1811
          %1817 = dma.vmem_to_hbm [thread:$0]  %s1812, 256, %s9, [#allocation9], 128, 128, 8
        $region68: #{tpu_custom_call.1} parent=55 // pred_fallthru
          _
        // Predicated region
        $region69: #{tpu_custom_call.1} parent=55 // pred_check
          %p1818 = pneg %p238
        $region70: #{tpu_custom_call.1} parent=55 // pred_check_branch
          %1820 = sbr.rel (%p1818) target = $region72
        $region71: #{tpu_custom_call.1} parent=55 // pred_region
          %1821 = dma.done [#allocation9], 256
        $region72: #{tpu_custom_call.1} parent=55 // pred_fallthru
          _
      $region56: #{tpu_custom_call.1} parent=5 // pred_fallthru
        _
      %p1822 = scmp.le.s32.totalorder 2, %s16
      // Predicated region
      $region73: #{tpu_custom_call.1} parent=5 // pred_check
        %p1823 = pneg %p1822
      $region74: #{tpu_custom_call.1} parent=5 // pred_check_branch
        %1825 = sbr.rel (%p1823) target = $region76
      $region75: #{tpu_custom_call.1} parent=5 // pred_region
        %s1826 = ssub.s32 %s16, 2
      $region76: #{tpu_custom_call.1} parent=5 // pred_fallthru
        _
    $region6: #{tpu_custom_call.1} parent=1 // loop_footer
      %s20 = sadd.s32 1, %s16
    $region7: #{tpu_custom_call.1} parent=1 // loop_footer_branch
      %15 = sbr.rel target = $region3
    $region8: #{tpu_custom_call.1} parent=1 // loop_exit
      _
    %1827 = vsyncpa [#allocation9], 1
    %s1828 = scalar_lea.sflag [#allocation9], 1
    %1829 = vsyncpa %s1828, 1

</llo_original>
